<compile_context>
chip_gen: v7x
topology: tpu7x:2x2x1
jax: 0.10.0
libtpu: 0.0.40
codegen_flags: <defaults>
</compile_context>

<pallas_src>
import functools

import jax
import jax.numpy as jnp
from jax import lax
from jax.experimental import pallas as pl
from jax.experimental.pallas import tpu as pltpu

_LN_EPS = 1e-5
_SQRT_2_OVER_PI = 0.7978845608028654

# dot_general dimension numbers (2-D operands)
_TN = (((0,), (0,)), ((), ()))  # contract dim0 with dim0  (lhs "transposed")
_NT = (((1,), (1,)), ((), ()))  # contract dim1 with dim1  (rhs "transposed")


def _gelu(x):
    # TODO(synk): PyTorch nn.GELU() defaults to the exact erf form; the tanh
    # approximation is used for guaranteed Mosaic lowering (|err| ~ 1e-3).
    return 0.5 * x * (1.0 + jnp.tanh(_SQRT_2_OVER_PI * (x + 0.044715 * x * x * x)))


def _layernorm_cm(x_cm, gamma_c1, beta_c1):
    # x_cm: (C, S); LayerNorm over the channel axis (axis 0), affine per channel.
    mu = jnp.mean(x_cm, axis=0, keepdims=True)
    var = jnp.mean((x_cm - mu) ** 2, axis=0, keepdims=True)
    return (x_cm - mu) * lax.rsqrt(var + _LN_EPS) * gamma_c1 + beta_c1


def _self_attn_block_kernel(
    x_ref, g1_ref, b1n_ref, wqkv_ref, wproj_ref, bproj_ref,
    g2_ref, b2n_ref, wfc1_ref, bfc1_ref, wfc2_ref, bfc2_ref,
    o_ref, *, num_heads, head_dim, scale):
    C = num_heads * head_dim
    x = x_ref[...].astype(jnp.float32)                       # (C, S) channel-major

    # ---- LayerNorm 1 ----
    h = _layernorm_cm(x, g1_ref[...], b1n_ref[...])

    # ---- QKV projection (no bias): (3C, S) = Wqkv @ h ----
    qkv = jnp.dot(wqkv_ref[...], h, preferred_element_type=jnp.float32)

    # ---- multi-head attention (statically unrolled over heads) ----
    head_outs = []
    for hh in range(num_heads):
        lo = hh * head_dim
        q_h = qkv[lo:lo + head_dim, :]                        # (hd, S)
        k_h = qkv[C + lo:C + lo + head_dim, :]                # (hd, S)
        v_h = qkv[2 * C + lo:2 * C + lo + head_dim, :]        # (hd, S)
        # logits[q, k] = sum_d q_h[d, q] * k_h[d, k]
        logits = lax.dot_general(q_h, k_h, _TN,
                                 preferred_element_type=jnp.float32) * scale
        logits = logits - jnp.max(logits, axis=-1, keepdims=True)
        p = jnp.exp(logits)
        p = p / jnp.sum(p, axis=-1, keepdims=True)            # softmax over keys
        # out_h[d, q] = sum_k v_h[d, k] * p[q, k]
        out_h = lax.dot_general(v_h, p, _NT,
                                preferred_element_type=jnp.float32)  # (hd, S)
        head_outs.append(out_h)
    attn_cm = jnp.concatenate(head_outs, axis=0)              # (C, S)

    # ---- output projection + residual ----
    y = x + jnp.dot(wproj_ref[...], attn_cm,
                    preferred_element_type=jnp.float32) + bproj_ref[...]

    # ---- LayerNorm 2 + MLP + residual ----
    h2 = _layernorm_cm(y, g2_ref[...], b2n_ref[...])
    z = jnp.dot(wfc1_ref[...], h2, preferred_element_type=jnp.float32) + bfc1_ref[...]
    z = _gelu(z)
    m = jnp.dot(wfc2_ref[...], z, preferred_element_type=jnp.float32) + bfc2_ref[...]

    o_ref[...] = (y + m).astype(o_ref.dtype)


def self_attn_forward(x, params, *, num_heads):
    """Fused SelfAttn block. x: (B, C, H, W) float32 -> (B, C, H, W)."""
    B, C, H, W = x.shape
    S = H * W
    head_dim = C // num_heads
    assert head_dim * num_heads == C
    scale = float(head_dim) ** -0.5
    hidden = params["w_fc1"].shape[0]

    # Free reshape only (no XLA transpose): channel-major (B, C, S), S on lanes.
    x_cm = x.reshape(B, C, S)

    col = lambda v: v.reshape(-1, 1).astype(jnp.float32)      # per-channel params as (C, 1)
    g1, b1n = col(params["ln1_g"]), col(params["ln1_b"])
    g2, b2n = col(params["ln2_g"]), col(params["ln2_b"])
    bproj, bfc1, bfc2 = col(params["b_proj"]), col(params["b_fc1"]), col(params["b_fc2"])
    wqkv, wproj = params["w_qkv"], params["w_proj"]
    wfc1, wfc2 = params["w_fc1"], params["w_fc2"]

    kernel = functools.partial(_self_attn_block_kernel,
                               num_heads=num_heads, head_dim=head_dim, scale=scale)

    def resident(shape):
        return pl.BlockSpec(shape, lambda b: (0,) * len(shape))

    out_cm = pl.pallas_call(
        kernel,
        out_shape=jax.ShapeDtypeStruct((B, C, S), x.dtype),
        grid_spec=pltpu.PrefetchScalarGridSpec(
            num_scalar_prefetch=0,
            grid=(B,),
            in_specs=[
                pl.BlockSpec((None, C, S), lambda b: (b, 0, 0)),  # x, one batch element
                resident((C, 1)),            # LN1 gamma
                resident((C, 1)),            # LN1 beta
                resident((3 * C, C)),        # W_qkv (PyTorch (out,in) layout, used as-is)
                resident((C, C)),            # W_proj
                resident((C, 1)),            # b_proj
                resident((C, 1)),            # LN2 gamma
                resident((C, 1)),            # LN2 beta
                resident((hidden, C)),       # W_fc1
                resident((hidden, 1)),       # b_fc1
                resident((C, hidden)),       # W_fc2
                resident((C, 1)),            # b_fc2
            ],
            out_specs=pl.BlockSpec((None, C, S), lambda b: (b, 0, 0)),
        ),
        compiler_params=pltpu.CompilerParams(
            dimension_semantics=("parallel",),       # batch axis shards across TCs
            vmem_limit_bytes=32 * 1024 * 1024,       # safe on v5e/v6e/v7x; tiny usage here
        ),
    )(x_cm, g1, b1n, wqkv, wproj, bproj, g2, b2n, wfc1, bfc1, wfc2, bfc2)

    return out_cm.reshape(B, C, H, W)


def self_attn_reference(x, params, *, num_heads):
    """Plain-JAX reference, token-major, mirroring the PyTorch forward."""
    B, C, H, W = x.shape
    S = H * W
    hd = C // num_heads
    scale = float(hd) ** -0.5
    t = x.reshape(B, C, S).transpose(0, 2, 1)                 # (B, S, C)

    def ln(v, g, b):
        mu = v.mean(-1, keepdims=True)
        var = ((v - mu) ** 2).mean(-1, keepdims=True)
        return (v - mu) * lax.rsqrt(var + _LN_EPS) * g + b

    h = ln(t, params["ln1_g"], params["ln1_b"])
    qkv = h @ params["w_qkv"].T                                # (B, S, 3C)
    qkv = qkv.reshape(B, S, 3, num_heads, hd).transpose(2, 0, 3, 1, 4)
    q, k, v = qkv[0], qkv[1], qkv[2]                           # (B, nh, S, hd)
    attn = (q @ jnp.swapaxes(k, -1, -2)) * scale
    attn = jax.nn.softmax(attn, axis=-1)
    o = (attn @ v).transpose(0, 2, 1, 3).reshape(B, S, C)
    t = t + o @ params["w_proj"].T + params["b_proj"]

    h2 = ln(t, params["ln2_g"], params["ln2_b"])
    m = _gelu(h2 @ params["w_fc1"].T + params["b_fc1"])
    m = m @ params["w_fc2"].T + params["b_fc2"]
    t = t + m
    return t.transpose(0, 2, 1).reshape(B, C, H, W)


if __name__ == "__main__":
    key = jax.random.PRNGKey(0)
    ks = jax.random.split(key, 12)

    # Small shapes consistent with the module: dim=32, 4 heads (head_dim=8),
    # 8x8 spatial (S=64), mlp_ratio=4 (hidden=128).
    B, C, H, W = 2, 32, 8, 8
    num_heads = 4
    hidden = int(C * 4.0)

    x = jax.random.normal(ks[0], (B, C, H, W), dtype=jnp.float32)
    params = {
        "ln1_g": 1.0 + 0.1 * jax.random.normal(ks[1], (C,), jnp.float32),
        "ln1_b": 0.1 * jax.random.normal(ks[2], (C,), jnp.float32),
        "w_qkv": 0.1 * jax.random.normal(ks[3], (3 * C, C), jnp.float32),
        "w_proj": 0.1 * jax.random.normal(ks[4], (C, C), jnp.float32),
        "b_proj": 0.1 * jax.random.normal(ks[5], (C,), jnp.float32),
        "ln2_g": 1.0 + 0.1 * jax.random.normal(ks[6], (C,), jnp.float32),
        "ln2_b": 0.1 * jax.random.normal(ks[7], (C,), jnp.float32),
        "w_fc1": 0.1 * jax.random.normal(ks[8], (hidden, C), jnp.float32),
        "b_fc1": 0.1 * jax.random.normal(ks[9], (hidden,), jnp.float32),
        "w_fc2": 0.1 * jax.random.normal(ks[10], (C, hidden), jnp.float32),
        "b_fc2": 0.1 * jax.random.normal(ks[11], (C,), jnp.float32),
    }

    out = self_attn_forward(x, params, num_heads=num_heads)
    out = jax.block_until_ready(out)

    ref = self_attn_reference(x, params, num_heads=num_heads)
    assert out.shape == x.shape and out.dtype == x.dtype
    max_err = float(jnp.max(jnp.abs(out - ref)))
    assert jnp.allclose(out, ref, atol=1e-4, rtol=1e-4), f"max abs err = {max_err}"
    print("KERNEL_OK")
</pallas_src>

<mosaic_0001>
module attributes {stable_mosaic.version = 11 : i64} {
  func.func @_self_attn_block_kernel(%arg0: i32, %arg1: memref<1x32x64xf32, #tpu.memory_space<vmem>>, %arg2: memref<32x1xf32, #tpu.memory_space<vmem>>, %arg3: memref<32x1xf32, #tpu.memory_space<vmem>>, %arg4: memref<96x32xf32, #tpu.memory_space<vmem>>, %arg5: memref<32x32xf32, #tpu.memory_space<vmem>>, %arg6: memref<32x1xf32, #tpu.memory_space<vmem>>, %arg7: memref<32x1xf32, #tpu.memory_space<vmem>>, %arg8: memref<32x1xf32, #tpu.memory_space<vmem>>, %arg9: memref<128x32xf32, #tpu.memory_space<vmem>>, %arg10: memref<128x1xf32, #tpu.memory_space<vmem>>, %arg11: memref<32x128xf32, #tpu.memory_space<vmem>>, %arg12: memref<32x1xf32, #tpu.memory_space<vmem>>, %arg13: memref<1x32x64xf32, #tpu.memory_space<vmem>>) attributes {dimension_semantics = [#tpu.dimension_semantics<parallel>], iteration_bounds = array<i64: 2>, scalar_prefetch = 0 : i64, scratch_operands = 0 : i64, tpu.core_type = #tpu.core_type<tc>, window_params = [{transform_indices = @transform_0, window_bounds = array<i64: 1, 32, 64>}, {pipeline_mode = #tpu.pipeline_mode<synchronous>, transform_indices = @transform_1, window_bounds = array<i64: 32, 1>}, {pipeline_mode = #tpu.pipeline_mode<synchronous>, transform_indices = @transform_2, window_bounds = array<i64: 32, 1>}, {pipeline_mode = #tpu.pipeline_mode<synchronous>, transform_indices = @transform_3, window_bounds = array<i64: 96, 32>}, {pipeline_mode = #tpu.pipeline_mode<synchronous>, transform_indices = @transform_4, window_bounds = array<i64: 32, 32>}, {pipeline_mode = #tpu.pipeline_mode<synchronous>, transform_indices = @transform_5, window_bounds = array<i64: 32, 1>}, {pipeline_mode = #tpu.pipeline_mode<synchronous>, transform_indices = @transform_6, window_bounds = array<i64: 32, 1>}, {pipeline_mode = #tpu.pipeline_mode<synchronous>, transform_indices = @transform_7, window_bounds = array<i64: 32, 1>}, {pipeline_mode = #tpu.pipeline_mode<synchronous>, transform_indices = @transform_8, window_bounds = array<i64: 128, 32>}, {pipeline_mode = #tpu.pipeline_mode<synchronous>, transform_indices = @transform_9, window_bounds = array<i64: 128, 1>}, {pipeline_mode = #tpu.pipeline_mode<synchronous>, transform_indices = @transform_10, window_bounds = array<i64: 32, 128>}, {pipeline_mode = #tpu.pipeline_mode<synchronous>, transform_indices = @transform_11, window_bounds = array<i64: 32, 1>}, {transform_indices = @transform_12, window_bounds = array<i64: 1, 32, 64>}]} {
    %c0 = arith.constant 0 : index
    %c0_0 = arith.constant 0 : index
    %c0_1 = arith.constant 0 : index
    %0 = vector.load %arg1[%c0, %c0_0, %c0_1] : memref<1x32x64xf32, #tpu.memory_space<vmem>>, vector<1x32x64xf32>
    %1 = vector.shape_cast %0 : vector<1x32x64xf32> to vector<32x64xf32>
    %c0_2 = arith.constant 0 : index
    %c0_3 = arith.constant 0 : index
    %2 = vector.load %arg2[%c0_2, %c0_3] : memref<32x1xf32, #tpu.memory_space<vmem>>, vector<32x1xf32>
    %c0_4 = arith.constant 0 : index
    %c0_5 = arith.constant 0 : index
    %3 = vector.load %arg3[%c0_4, %c0_5] : memref<32x1xf32, #tpu.memory_space<vmem>>, vector<32x1xf32>
    %cst = arith.constant dense<0.000000e+00> : vector<64xf32>
    %4 = vector.multi_reduction <add>, %1, %cst [0] : vector<32x64xf32> to vector<64xf32>
    %5 = vector.shape_cast %4 : vector<64xf32> to vector<1x64xf32>
    %cst_6 = arith.constant 3.200000e+01 : f32
    %6 = vector.broadcast %cst_6 : f32 to vector<1x64xf32>
    %7 = arith.divf %5, %6 : vector<1x64xf32>
    %8 = vector.broadcast %7 : vector<1x64xf32> to vector<32x64xf32>
    %9 = arith.subf %1, %8 : vector<32x64xf32>
    %10 = arith.mulf %9, %9 : vector<32x64xf32>
    %cst_7 = arith.constant dense<0.000000e+00> : vector<64xf32>
    %11 = vector.multi_reduction <add>, %10, %cst_7 [0] : vector<32x64xf32> to vector<64xf32>
    %12 = vector.shape_cast %11 : vector<64xf32> to vector<1x64xf32>
    %cst_8 = arith.constant 3.200000e+01 : f32
    %13 = vector.broadcast %cst_8 : f32 to vector<1x64xf32>
    %14 = arith.divf %12, %13 : vector<1x64xf32>
    %15 = vector.broadcast %7 : vector<1x64xf32> to vector<32x64xf32>
    %16 = arith.subf %1, %15 : vector<32x64xf32>
    %cst_9 = arith.constant 9.99999974E-6 : f32
    %17 = vector.broadcast %cst_9 : f32 to vector<1x64xf32>
    %18 = arith.addf %14, %17 : vector<1x64xf32>
    %19 = math.rsqrt %18 : vector<1x64xf32>
    %20 = vector.broadcast %19 : vector<1x64xf32> to vector<32x64xf32>
    %21 = arith.mulf %16, %20 : vector<32x64xf32>
    %22 = vector.broadcast %2 : vector<32x1xf32> to vector<32x64xf32>
    %23 = arith.mulf %21, %22 : vector<32x64xf32>
    %24 = vector.broadcast %3 : vector<32x1xf32> to vector<32x64xf32>
    %25 = arith.addf %23, %24 : vector<32x64xf32>
    %c0_10 = arith.constant 0 : index
    %c0_11 = arith.constant 0 : index
    %26 = vector.load %arg4[%c0_10, %c0_11] : memref<96x32xf32, #tpu.memory_space<vmem>>, vector<96x32xf32>
    %cst_12 = arith.constant dense<0.000000e+00> : vector<96x64xf32>
    %27 = tpu.matmul %26, %25, %cst_12 {dimension_numbers = #tpu.dot_dimension_numbers<[1], [0], [0], [1], [0, 0, 1, 1], [], []>} : vector<96x32xf32>, vector<32x64xf32>, vector<96x64xf32> -> vector<96x64xf32>
    %28 = vector.extract_strided_slice %27 {offsets = [0, 0], sizes = [8, 64], strides = [1, 1]} : vector<96x64xf32> to vector<8x64xf32>
    %29 = vector.extract_strided_slice %27 {offsets = [32, 0], sizes = [8, 64], strides = [1, 1]} : vector<96x64xf32> to vector<8x64xf32>
    %30 = vector.extract_strided_slice %27 {offsets = [64, 0], sizes = [8, 64], strides = [1, 1]} : vector<96x64xf32> to vector<8x64xf32>
    %cst_13 = arith.constant dense<0.000000e+00> : vector<64x64xf32>
    %31 = tpu.matmul %28, %29, %cst_13 {dimension_numbers = #tpu.dot_dimension_numbers<[0], [0], [1], [1], [0, 1, 1, 1], [], []>} : vector<8x64xf32>, vector<8x64xf32>, vector<64x64xf32> -> vector<64x64xf32>
    %cst_14 = arith.constant 0.353553385 : f32
    %32 = vector.broadcast %cst_14 : f32 to vector<64x64xf32>
    %33 = arith.mulf %31, %32 : vector<64x64xf32>
    %cst_15 = arith.constant dense<0xFF800000> : vector<64xf32>
    %34 = vector.multi_reduction <maximumf>, %33, %cst_15 [1] : vector<64x64xf32> to vector<64xf32>
    %35 = vector.shape_cast %34 : vector<64xf32> to vector<64x1xf32>
    %36 = vector.broadcast %35 : vector<64x1xf32> to vector<64x64xf32>
    %37 = arith.subf %33, %36 : vector<64x64xf32>
    %38 = math.exp %37 : vector<64x64xf32>
    %cst_16 = arith.constant dense<0.000000e+00> : vector<64xf32>
    %39 = vector.multi_reduction <add>, %38, %cst_16 [1] : vector<64x64xf32> to vector<64xf32>
    %40 = vector.shape_cast %39 : vector<64xf32> to vector<64x1xf32>
    %41 = vector.broadcast %40 : vector<64x1xf32> to vector<64x64xf32>
    %42 = arith.divf %38, %41 : vector<64x64xf32>
    %cst_17 = arith.constant dense<0.000000e+00> : vector<8x64xf32>
    %43 = tpu.matmul %30, %42, %cst_17 {dimension_numbers = #tpu.dot_dimension_numbers<[1], [1], [0], [0], [0, 0, 1, 0], [], []>} : vector<8x64xf32>, vector<64x64xf32>, vector<8x64xf32> -> vector<8x64xf32>
    %44 = vector.extract_strided_slice %27 {offsets = [8, 0], sizes = [8, 64], strides = [1, 1]} : vector<96x64xf32> to vector<8x64xf32>
    %45 = vector.extract_strided_slice %27 {offsets = [40, 0], sizes = [8, 64], strides = [1, 1]} : vector<96x64xf32> to vector<8x64xf32>
    %46 = vector.extract_strided_slice %27 {offsets = [72, 0], sizes = [8, 64], strides = [1, 1]} : vector<96x64xf32> to vector<8x64xf32>
    %cst_18 = arith.constant dense<0.000000e+00> : vector<64x64xf32>
    %47 = tpu.matmul %44, %45, %cst_18 {dimension_numbers = #tpu.dot_dimension_numbers<[0], [0], [1], [1], [0, 1, 1, 1], [], []>} : vector<8x64xf32>, vector<8x64xf32>, vector<64x64xf32> -> vector<64x64xf32>
    %cst_19 = arith.constant 0.353553385 : f32
    %48 = vector.broadcast %cst_19 : f32 to vector<64x64xf32>
    %49 = arith.mulf %47, %48 : vector<64x64xf32>
    %cst_20 = arith.constant dense<0xFF800000> : vector<64xf32>
    %50 = vector.multi_reduction <maximumf>, %49, %cst_20 [1] : vector<64x64xf32> to vector<64xf32>
    %51 = vector.shape_cast %50 : vector<64xf32> to vector<64x1xf32>
    %52 = vector.broadcast %51 : vector<64x1xf32> to vector<64x64xf32>
    %53 = arith.subf %49, %52 : vector<64x64xf32>
    %54 = math.exp %53 : vector<64x64xf32>
    %cst_21 = arith.constant dense<0.000000e+00> : vector<64xf32>
    %55 = vector.multi_reduction <add>, %54, %cst_21 [1] : vector<64x64xf32> to vector<64xf32>
    %56 = vector.shape_cast %55 : vector<64xf32> to vector<64x1xf32>
    %57 = vector.broadcast %56 : vector<64x1xf32> to vector<64x64xf32>
    %58 = arith.divf %54, %57 : vector<64x64xf32>
    %cst_22 = arith.constant dense<0.000000e+00> : vector<8x64xf32>
    %59 = tpu.matmul %46, %58, %cst_22 {dimension_numbers = #tpu.dot_dimension_numbers<[1], [1], [0], [0], [0, 0, 1, 0], [], []>} : vector<8x64xf32>, vector<64x64xf32>, vector<8x64xf32> -> vector<8x64xf32>
    %60 = vector.extract_strided_slice %27 {offsets = [16, 0], sizes = [8, 64], strides = [1, 1]} : vector<96x64xf32> to vector<8x64xf32>
    %61 = vector.extract_strided_slice %27 {offsets = [48, 0], sizes = [8, 64], strides = [1, 1]} : vector<96x64xf32> to vector<8x64xf32>
    %62 = vector.extract_strided_slice %27 {offsets = [80, 0], sizes = [8, 64], strides = [1, 1]} : vector<96x64xf32> to vector<8x64xf32>
    %cst_23 = arith.constant dense<0.000000e+00> : vector<64x64xf32>
    %63 = tpu.matmul %60, %61, %cst_23 {dimension_numbers = #tpu.dot_dimension_numbers<[0], [0], [1], [1], [0, 1, 1, 1], [], []>} : vector<8x64xf32>, vector<8x64xf32>, vector<64x64xf32> -> vector<64x64xf32>
    %cst_24 = arith.constant 0.353553385 : f32
    %64 = vector.broadcast %cst_24 : f32 to vector<64x64xf32>
    %65 = arith.mulf %63, %64 : vector<64x64xf32>
    %cst_25 = arith.constant dense<0xFF800000> : vector<64xf32>
    %66 = vector.multi_reduction <maximumf>, %65, %cst_25 [1] : vector<64x64xf32> to vector<64xf32>
    %67 = vector.shape_cast %66 : vector<64xf32> to vector<64x1xf32>
    %68 = vector.broadcast %67 : vector<64x1xf32> to vector<64x64xf32>
    %69 = arith.subf %65, %68 : vector<64x64xf32>
    %70 = math.exp %69 : vector<64x64xf32>
    %cst_26 = arith.constant dense<0.000000e+00> : vector<64xf32>
    %71 = vector.multi_reduction <add>, %70, %cst_26 [1] : vector<64x64xf32> to vector<64xf32>
    %72 = vector.shape_cast %71 : vector<64xf32> to vector<64x1xf32>
    %73 = vector.broadcast %72 : vector<64x1xf32> to vector<64x64xf32>
    %74 = arith.divf %70, %73 : vector<64x64xf32>
    %cst_27 = arith.constant dense<0.000000e+00> : vector<8x64xf32>
    %75 = tpu.matmul %62, %74, %cst_27 {dimension_numbers = #tpu.dot_dimension_numbers<[1], [1], [0], [0], [0, 0, 1, 0], [], []>} : vector<8x64xf32>, vector<64x64xf32>, vector<8x64xf32> -> vector<8x64xf32>
    %76 = vector.extract_strided_slice %27 {offsets = [24, 0], sizes = [8, 64], strides = [1, 1]} : vector<96x64xf32> to vector<8x64xf32>
    %77 = vector.extract_strided_slice %27 {offsets = [56, 0], sizes = [8, 64], strides = [1, 1]} : vector<96x64xf32> to vector<8x64xf32>
    %78 = vector.extract_strided_slice %27 {offsets = [88, 0], sizes = [8, 64], strides = [1, 1]} : vector<96x64xf32> to vector<8x64xf32>
    %cst_28 = arith.constant dense<0.000000e+00> : vector<64x64xf32>
    %79 = tpu.matmul %76, %77, %cst_28 {dimension_numbers = #tpu.dot_dimension_numbers<[0], [0], [1], [1], [0, 1, 1, 1], [], []>} : vector<8x64xf32>, vector<8x64xf32>, vector<64x64xf32> -> vector<64x64xf32>
    %cst_29 = arith.constant 0.353553385 : f32
    %80 = vector.broadcast %cst_29 : f32 to vector<64x64xf32>
    %81 = arith.mulf %79, %80 : vector<64x64xf32>
    %cst_30 = arith.constant dense<0xFF800000> : vector<64xf32>
    %82 = vector.multi_reduction <maximumf>, %81, %cst_30 [1] : vector<64x64xf32> to vector<64xf32>
    %83 = vector.shape_cast %82 : vector<64xf32> to vector<64x1xf32>
    %84 = vector.broadcast %83 : vector<64x1xf32> to vector<64x64xf32>
    %85 = arith.subf %81, %84 : vector<64x64xf32>
    %86 = math.exp %85 : vector<64x64xf32>
    %cst_31 = arith.constant dense<0.000000e+00> : vector<64xf32>
    %87 = vector.multi_reduction <add>, %86, %cst_31 [1] : vector<64x64xf32> to vector<64xf32>
    %88 = vector.shape_cast %87 : vector<64xf32> to vector<64x1xf32>
    %89 = vector.broadcast %88 : vector<64x1xf32> to vector<64x64xf32>
    %90 = arith.divf %86, %89 : vector<64x64xf32>
    %cst_32 = arith.constant dense<0.000000e+00> : vector<8x64xf32>
    %91 = tpu.matmul %78, %90, %cst_32 {dimension_numbers = #tpu.dot_dimension_numbers<[1], [1], [0], [0], [0, 0, 1, 0], [], []>} : vector<8x64xf32>, vector<64x64xf32>, vector<8x64xf32> -> vector<8x64xf32>
    %92 = tpu.concatenate %43, %59, %75, %91 in 0 : vector<8x64xf32>, vector<8x64xf32>, vector<8x64xf32>, vector<8x64xf32> -> vector<32x64xf32>
    %c0_33 = arith.constant 0 : index
    %c0_34 = arith.constant 0 : index
    %93 = vector.load %arg5[%c0_33, %c0_34] : memref<32x32xf32, #tpu.memory_space<vmem>>, vector<32x32xf32>
    %cst_35 = arith.constant dense<0.000000e+00> : vector<32x64xf32>
    %94 = tpu.matmul %93, %92, %cst_35 {dimension_numbers = #tpu.dot_dimension_numbers<[1], [0], [0], [1], [0, 0, 1, 1], [], []>} : vector<32x32xf32>, vector<32x64xf32>, vector<32x64xf32> -> vector<32x64xf32>
    %95 = arith.addf %1, %94 : vector<32x64xf32>
    %c0_36 = arith.constant 0 : index
    %c0_37 = arith.constant 0 : index
    %96 = vector.load %arg6[%c0_36, %c0_37] : memref<32x1xf32, #tpu.memory_space<vmem>>, vector<32x1xf32>
    %97 = vector.broadcast %96 : vector<32x1xf32> to vector<32x64xf32>
    %98 = arith.addf %95, %97 : vector<32x64xf32>
    %c0_38 = arith.constant 0 : index
    %c0_39 = arith.constant 0 : index
    %99 = vector.load %arg7[%c0_38, %c0_39] : memref<32x1xf32, #tpu.memory_space<vmem>>, vector<32x1xf32>
    %c0_40 = arith.constant 0 : index
    %c0_41 = arith.constant 0 : index
    %100 = vector.load %arg8[%c0_40, %c0_41] : memref<32x1xf32, #tpu.memory_space<vmem>>, vector<32x1xf32>
    %cst_42 = arith.constant dense<0.000000e+00> : vector<64xf32>
    %101 = vector.multi_reduction <add>, %98, %cst_42 [0] : vector<32x64xf32> to vector<64xf32>
    %102 = vector.shape_cast %101 : vector<64xf32> to vector<1x64xf32>
    %cst_43 = arith.constant 3.200000e+01 : f32
    %103 = vector.broadcast %cst_43 : f32 to vector<1x64xf32>
    %104 = arith.divf %102, %103 : vector<1x64xf32>
    %105 = vector.broadcast %104 : vector<1x64xf32> to vector<32x64xf32>
    %106 = arith.subf %98, %105 : vector<32x64xf32>
    %107 = arith.mulf %106, %106 : vector<32x64xf32>
    %cst_44 = arith.constant dense<0.000000e+00> : vector<64xf32>
    %108 = vector.multi_reduction <add>, %107, %cst_44 [0] : vector<32x64xf32> to vector<64xf32>
    %109 = vector.shape_cast %108 : vector<64xf32> to vector<1x64xf32>
    %cst_45 = arith.constant 3.200000e+01 : f32
    %110 = vector.broadcast %cst_45 : f32 to vector<1x64xf32>
    %111 = arith.divf %109, %110 : vector<1x64xf32>
    %112 = vector.broadcast %104 : vector<1x64xf32> to vector<32x64xf32>
    %113 = arith.subf %98, %112 : vector<32x64xf32>
    %cst_46 = arith.constant 9.99999974E-6 : f32
    %114 = vector.broadcast %cst_46 : f32 to vector<1x64xf32>
    %115 = arith.addf %111, %114 : vector<1x64xf32>
    %116 = math.rsqrt %115 : vector<1x64xf32>
    %117 = vector.broadcast %116 : vector<1x64xf32> to vector<32x64xf32>
    %118 = arith.mulf %113, %117 : vector<32x64xf32>
    %119 = vector.broadcast %99 : vector<32x1xf32> to vector<32x64xf32>
    %120 = arith.mulf %118, %119 : vector<32x64xf32>
    %121 = vector.broadcast %100 : vector<32x1xf32> to vector<32x64xf32>
    %122 = arith.addf %120, %121 : vector<32x64xf32>
    %c0_47 = arith.constant 0 : index
    %c0_48 = arith.constant 0 : index
    %123 = vector.load %arg9[%c0_47, %c0_48] : memref<128x32xf32, #tpu.memory_space<vmem>>, vector<128x32xf32>
    %cst_49 = arith.constant dense<0.000000e+00> : vector<128x64xf32>
    %124 = tpu.matmul %123, %122, %cst_49 {dimension_numbers = #tpu.dot_dimension_numbers<[1], [0], [0], [1], [0, 0, 1, 1], [], []>} : vector<128x32xf32>, vector<32x64xf32>, vector<128x64xf32> -> vector<128x64xf32>
    %c0_50 = arith.constant 0 : index
    %c0_51 = arith.constant 0 : index
    %125 = vector.load %arg10[%c0_50, %c0_51] : memref<128x1xf32, #tpu.memory_space<vmem>>, vector<128x1xf32>
    %126 = vector.broadcast %125 : vector<128x1xf32> to vector<128x64xf32>
    %127 = arith.addf %124, %126 : vector<128x64xf32>
    %cst_52 = arith.constant 5.000000e-01 : f32
    %128 = vector.broadcast %cst_52 : f32 to vector<128x64xf32>
    %129 = arith.mulf %128, %127 : vector<128x64xf32>
    %cst_53 = arith.constant 4.471500e-02 : f32
    %130 = vector.broadcast %cst_53 : f32 to vector<128x64xf32>
    %131 = arith.mulf %130, %127 : vector<128x64xf32>
    %132 = arith.mulf %131, %127 : vector<128x64xf32>
    %133 = arith.mulf %132, %127 : vector<128x64xf32>
    %134 = arith.addf %127, %133 : vector<128x64xf32>
    %cst_54 = arith.constant 0.797884583 : f32
    %135 = vector.broadcast %cst_54 : f32 to vector<128x64xf32>
    %136 = arith.mulf %135, %134 : vector<128x64xf32>
    %137 = math.tanh %136 : vector<128x64xf32>
    %cst_55 = arith.constant 1.000000e+00 : f32
    %138 = vector.broadcast %cst_55 : f32 to vector<128x64xf32>
    %139 = arith.addf %138, %137 : vector<128x64xf32>
    %140 = arith.mulf %129, %139 : vector<128x64xf32>
    %c0_56 = arith.constant 0 : index
    %c0_57 = arith.constant 0 : index
    %141 = vector.load %arg11[%c0_56, %c0_57] : memref<32x128xf32, #tpu.memory_space<vmem>>, vector<32x128xf32>
    %cst_58 = arith.constant dense<0.000000e+00> : vector<32x64xf32>
    %142 = tpu.matmul %141, %140, %cst_58 {dimension_numbers = #tpu.dot_dimension_numbers<[1], [0], [0], [1], [0, 0, 1, 1], [], []>} : vector<32x128xf32>, vector<128x64xf32>, vector<32x64xf32> -> vector<32x64xf32>
    %c0_59 = arith.constant 0 : index
    %c0_60 = arith.constant 0 : index
    %143 = vector.load %arg12[%c0_59, %c0_60] : memref<32x1xf32, #tpu.memory_space<vmem>>, vector<32x1xf32>
    %144 = vector.broadcast %143 : vector<32x1xf32> to vector<32x64xf32>
    %145 = arith.addf %142, %144 : vector<32x64xf32>
    %146 = arith.addf %98, %145 : vector<32x64xf32>
    %c0_61 = arith.constant 0 : index
    %c0_62 = arith.constant 0 : index
    %c0_63 = arith.constant 0 : index
    %147 = vector.load %arg13[%c0_61, %c0_62, %c0_63] : memref<1x32x64xf32, #tpu.memory_space<vmem>>, vector<1x32x64xf32>
    %148 = vector.shape_cast %147 : vector<1x32x64xf32> to vector<32x64xf32>
    %149 = vector.shape_cast %146 : vector<32x64xf32> to vector<1x32x64xf32>
    tpu.vector_store %arg13[%c0_61, %c0_62, %c0_63], %149 {strides = array<i32>} : memref<1x32x64xf32, #tpu.memory_space<vmem>>, vector<1x32x64xf32>,
    return
  }
  func.func @transform_0(%arg0: i32) -> (i32, i32, i32) {
    %c0_i32 = arith.constant 0 : i32
    %c0_i32_0 = arith.constant 0 : i32
    %c0_i32_1 = arith.constant 0 : i32
    return %arg0, %c0_i32, %c0_i32_0 : i32, i32, i32
  }
  func.func @transform_1(%arg0: i32) -> (i32, i32) {
    %c0_i32 = arith.constant 0 : i32
    %c0_i32_0 = arith.constant 0 : i32
    %c0_i32_1 = arith.constant 0 : i32
    return %c0_i32, %c0_i32_0 : i32, i32
  }
  func.func @transform_2(%arg0: i32) -> (i32, i32) {
    %c0_i32 = arith.constant 0 : i32
    %c0_i32_0 = arith.constant 0 : i32
    %c0_i32_1 = arith.constant 0 : i32
    return %c0_i32, %c0_i32_0 : i32, i32
  }
  func.func @transform_3(%arg0: i32) -> (i32, i32) {
    %c0_i32 = arith.constant 0 : i32
    %c0_i32_0 = arith.constant 0 : i32
    %c0_i32_1 = arith.constant 0 : i32
    return %c0_i32, %c0_i32_0 : i32, i32
  }
  func.func @transform_4(%arg0: i32) -> (i32, i32) {
    %c0_i32 = arith.constant 0 : i32
    %c0_i32_0 = arith.constant 0 : i32
    %c0_i32_1 = arith.constant 0 : i32
    return %c0_i32, %c0_i32_0 : i32, i32
  }
  func.func @transform_5(%arg0: i32) -> (i32, i32) {
    %c0_i32 = arith.constant 0 : i32
    %c0_i32_0 = arith.constant 0 : i32
    %c0_i32_1 = arith.constant 0 : i32
    return %c0_i32, %c0_i32_0 : i32, i32
  }
  func.func @transform_6(%arg0: i32) -> (i32, i32) {
    %c0_i32 = arith.constant 0 : i32
    %c0_i32_0 = arith.constant 0 : i32
    %c0_i32_1 = arith.constant 0 : i32
    return %c0_i32, %c0_i32_0 : i32, i32
  }
  func.func @transform_7(%arg0: i32) -> (i32, i32) {
    %c0_i32 = arith.constant 0 : i32
    %c0_i32_0 = arith.constant 0 : i32
    %c0_i32_1 = arith.constant 0 : i32
    return %c0_i32, %c0_i32_0 : i32, i32
  }
  func.func @transform_8(%arg0: i32) -> (i32, i32) {
    %c0_i32 = arith.constant 0 : i32
    %c0_i32_0 = arith.constant 0 : i32
    %c0_i32_1 = arith.constant 0 : i32
    return %c0_i32, %c0_i32_0 : i32, i32
  }
  func.func @transform_9(%arg0: i32) -> (i32, i32) {
    %c0_i32 = arith.constant 0 : i32
    %c0_i32_0 = arith.constant 0 : i32
    %c0_i32_1 = arith.constant 0 : i32
    return %c0_i32, %c0_i32_0 : i32, i32
  }
  func.func @transform_10(%arg0: i32) -> (i32, i32) {
    %c0_i32 = arith.constant 0 : i32
    %c0_i32_0 = arith.constant 0 : i32
    %c0_i32_1 = arith.constant 0 : i32
    return %c0_i32, %c0_i32_0 : i32, i32
  }
  func.func @transform_11(%arg0: i32) -> (i32, i32) {
    %c0_i32 = arith.constant 0 : i32
    %c0_i32_0 = arith.constant 0 : i32
    %c0_i32_1 = arith.constant 0 : i32
    return %c0_i32, %c0_i32_0 : i32, i32
  }
  func.func @transform_12(%arg0: i32) -> (i32, i32, i32) {
    %c0_i32 = arith.constant 0 : i32
    %c0_i32_0 = arith.constant 0 : i32
    %c0_i32_1 = arith.constant 0 : i32
    return %arg0, %c0_i32, %c0_i32_0 : i32, i32, i32
  }
}

</mosaic_0001>

<llo_original>
// kernel: tpu_custom_call.1
$region0: #{tpu_custom_call.1}
  #allocation0 [shape = 'u32[]', space=smem, size = 0x4, offset = 0x4, fixed_abs, tag = 'smem constant byte address 0x4 - core index']
  #allocation1 [shape = 'u32[144,128]{1,0:T(1,128)}', space=vmem, size = 0x12000, scoped, tag = 'internal scratch']
  %s0 = inlined_call_operand.vmem [shape: f32[2,32,64], index: 0, kind: input, shape index: {}]
  %s1 = inlined_call_operand.vmem [shape: f32[32,1], index: 1, kind: input, shape index: {}]
  %s2 = inlined_call_operand.vmem [shape: f32[32,1], index: 2, kind: input, shape index: {}]
  %s3 = inlined_call_operand.vmem [shape: f32[96,32], index: 3, kind: input, shape index: {}]
  %s4 = inlined_call_operand.vmem [shape: f32[32,32], index: 4, kind: input, shape index: {}]
  %s5 = inlined_call_operand.vmem [shape: f32[32,1], index: 5, kind: input, shape index: {}]
  %s6 = inlined_call_operand.vmem [shape: f32[32,1], index: 6, kind: input, shape index: {}]
  %s7 = inlined_call_operand.vmem [shape: f32[32,1], index: 7, kind: input, shape index: {}]
  %s8 = inlined_call_operand.vmem [shape: f32[128,32], index: 8, kind: input, shape index: {}]
  %s9 = inlined_call_operand.vmem [shape: f32[128,1], index: 9, kind: input, shape index: {}]
  %s10 = inlined_call_operand.vmem [shape: f32[32,128], index: 10, kind: input, shape index: {}]
  %s11 = inlined_call_operand.vmem [shape: f32[32,1], index: 11, kind: input, shape index: {}]
  %s12 = inlined_call_operand.hbm [shape: f32[2,32,64], index: 12, kind: output, shape index: {}]
  %s13 = sld [smem:[#allocation0]]
  $region81: #{tpu_custom_call.1} parent=0
    _
  %s15 = ssub.s32 1, %s13
  %s16 = scalar_select 0, %s15, %s13
  $region1: #{tpu_custom_call.1} parent=0
    #allocation2 [shape = 'u8[32768]{0}', space=vmem, size = 0x8000, scoped, tag = 'output window, operand 0']
    #allocation3 [shape = 's32[2]{0}', space=sflag, size = 0x8, scoped, tag = 'scoped memory for tpu_custom_call.1']
    %17 = vsyncpa [#allocation3], 0
    %s18 = scalar_lea.sflag [#allocation3], 1
    %19 = vsyncpa %s18, 0
    loop: start=0, step=1, limit=4
    $region2: #{tpu_custom_call.1} parent=1 // loop_pre_header
      _
    $region3: #{tpu_custom_call.1} parent=1 // loop_header
      %s21 = sphi 0, %s25
      %p22 = scmp.ge.s32.totalorder %s21, 4
      %s31 = sphi 0, %s33
      %s34 = sphi 0, %s31
      %s35 = sphi 0, %s34
      %s51 = sphi 0, %s35
      %s55 = sphi 0, %s55
      %s57 = sphi 0, %s55
      %s58 = sphi 0, %s57
      %s72 = sphi 0, %s58
      %s76 = sphi 0, %s76
      %s78 = sphi 0, %s76
      %s79 = sphi 0, %s78
      %s93 = sphi 0, %s79
      %s97 = sphi 0, %s97
      %s99 = sphi 0, %s97
      %s100 = sphi 0, %s99
      %s114 = sphi 0, %s100
      %s118 = sphi 0, %s118
      %s120 = sphi 0, %s118
      %s121 = sphi 0, %s120
      %s135 = sphi 0, %s121
      %s139 = sphi 0, %s139
      %s141 = sphi 0, %s139
      %s142 = sphi 0, %s141
      %s156 = sphi 0, %s142
      %s160 = sphi 0, %s160
      %s162 = sphi 0, %s160
      %s163 = sphi 0, %s162
      %s177 = sphi 0, %s163
      %s181 = sphi 0, %s181
      %s183 = sphi 0, %s181
      %s184 = sphi 0, %s183
      %s198 = sphi 0, %s184
      %s202 = sphi 0, %s202
      %s204 = sphi 0, %s202
      %s205 = sphi 0, %s204
      %s219 = sphi 0, %s205
      %s223 = sphi 0, %s223
      %s225 = sphi 0, %s223
      %s226 = sphi 0, %s225
      %s240 = sphi 0, %s226
      %s244 = sphi 0, %s244
      %s246 = sphi 0, %s244
      %s247 = sphi 0, %s246
      %s261 = sphi 0, %s247
      %s265 = sphi 0, %s265
      %s267 = sphi 0, %s265
      %s268 = sphi 0, %s267
      %s282 = sphi 0, %s268
      %s288 = sphi 0, %s290
      %s291 = sphi 0, %s288
      %s292 = sphi 0, %s291
      %s308 = sphi 0, %s292
    $region4: #{tpu_custom_call.1} parent=1 // loop_header_branch
      %24 = sbr.rel (%p22) target = $region8
    $region5: #{tpu_custom_call.1} parent=1 // loop_body
      %s26 = ssub.s32 %s21, 1
      %s27 = ssub.s32 %s21, 2
      %s28 = sadd.s32 %s21, 1
      %s29 = ssub.s32 %s21, %s28
      %p30 = scmp.eq.s32.totalorder %s29, 0
      %s32 = sadd.s32 %s31, 1
      %s33 = scalar_select %p30, %s31, %s32
      %p36 = pneg %p30
      %p37 = scmp.eq.s32.totalorder %s21, 1
      %p38 = por %p36, %p37
      %p39 = scmp.ne.s32.totalorder %s31, %s34
      %p40 = scmp.eq.s32.totalorder %s21, 0
      %p41 = por %p39, %p40
      %p42 = scmp.ne.s32.totalorder %s31, %s34
      %p43 = scmp.eq.s32.totalorder %s26, 1
      %p44 = por %p42, %p43
      %p45 = scmp.ne.s32.totalorder %s34, %s35
      %p46 = scmp.eq.s32.totalorder %s26, 0
      %p47 = por %p45, %p46
      %p48 = scmp.ne.s32.totalorder %s34, %s35
      %p49 = scmp.eq.s32.totalorder %s27, 1
      %p50 = por %p48, %p49
      %p52 = scmp.ne.s32.totalorder %s35, %s51
      %p53 = scmp.eq.s32.totalorder %s27, 0
      %p54 = por %p52, %p53
      %s56 = sadd.s32 %s55, 1
      %p59 = scmp.eq.s32.totalorder %s21, 1
      %p60 = scmp.ne.s32.totalorder %s55, %s57
      %p61 = scmp.eq.s32.totalorder %s21, 0
      %p62 = por %p60, %p61
      %p63 = scmp.ne.s32.totalorder %s55, %s57
      %p64 = scmp.eq.s32.totalorder %s26, 1
      %p65 = por %p63, %p64
      %p66 = scmp.ne.s32.totalorder %s57, %s58
      %p67 = scmp.eq.s32.totalorder %s26, 0
      %p68 = por %p66, %p67
      %p69 = scmp.ne.s32.totalorder %s57, %s58
      %p70 = scmp.eq.s32.totalorder %s27, 1
      %p71 = por %p69, %p70
      %p73 = scmp.ne.s32.totalorder %s58, %s72
      %p74 = scmp.eq.s32.totalorder %s27, 0
      %p75 = por %p73, %p74
      %s77 = sadd.s32 %s76, 1
      %p80 = scmp.eq.s32.totalorder %s21, 1
      %p81 = scmp.ne.s32.totalorder %s76, %s78
      %p82 = scmp.eq.s32.totalorder %s21, 0
      %p83 = por %p81, %p82
      %p84 = scmp.ne.s32.totalorder %s76, %s78
      %p85 = scmp.eq.s32.totalorder %s26, 1
      %p86 = por %p84, %p85
      %p87 = scmp.ne.s32.totalorder %s78, %s79
      %p88 = scmp.eq.s32.totalorder %s26, 0
      %p89 = por %p87, %p88
      %p90 = scmp.ne.s32.totalorder %s78, %s79
      %p91 = scmp.eq.s32.totalorder %s27, 1
      %p92 = por %p90, %p91
      %p94 = scmp.ne.s32.totalorder %s79, %s93
      %p95 = scmp.eq.s32.totalorder %s27, 0
      %p96 = por %p94, %p95
      %s98 = sadd.s32 %s97, 1
      %p101 = scmp.eq.s32.totalorder %s21, 1
      %p102 = scmp.ne.s32.totalorder %s97, %s99
      %p103 = scmp.eq.s32.totalorder %s21, 0
      %p104 = por %p102, %p103
      %p105 = scmp.ne.s32.totalorder %s97, %s99
      %p106 = scmp.eq.s32.totalorder %s26, 1
      %p107 = por %p105, %p106
      %p108 = scmp.ne.s32.totalorder %s99, %s100
      %p109 = scmp.eq.s32.totalorder %s26, 0
      %p110 = por %p108, %p109
      %p111 = scmp.ne.s32.totalorder %s99, %s100
      %p112 = scmp.eq.s32.totalorder %s27, 1
      %p113 = por %p111, %p112
      %p115 = scmp.ne.s32.totalorder %s100, %s114
      %p116 = scmp.eq.s32.totalorder %s27, 0
      %p117 = por %p115, %p116
      %s119 = sadd.s32 %s118, 1
      %p122 = scmp.eq.s32.totalorder %s21, 1
      %p123 = scmp.ne.s32.totalorder %s118, %s120
      %p124 = scmp.eq.s32.totalorder %s21, 0
      %p125 = por %p123, %p124
      %p126 = scmp.ne.s32.totalorder %s118, %s120
      %p127 = scmp.eq.s32.totalorder %s26, 1
      %p128 = por %p126, %p127
      %p129 = scmp.ne.s32.totalorder %s120, %s121
      %p130 = scmp.eq.s32.totalorder %s26, 0
      %p131 = por %p129, %p130
      %p132 = scmp.ne.s32.totalorder %s120, %s121
      %p133 = scmp.eq.s32.totalorder %s27, 1
      %p134 = por %p132, %p133
      %p136 = scmp.ne.s32.totalorder %s121, %s135
      %p137 = scmp.eq.s32.totalorder %s27, 0
      %p138 = por %p136, %p137
      %s140 = sadd.s32 %s139, 1
      %p143 = scmp.eq.s32.totalorder %s21, 1
      %p144 = scmp.ne.s32.totalorder %s139, %s141
      %p145 = scmp.eq.s32.totalorder %s21, 0
      %p146 = por %p144, %p145
      %p147 = scmp.ne.s32.totalorder %s139, %s141
      %p148 = scmp.eq.s32.totalorder %s26, 1
      %p149 = por %p147, %p148
      %p150 = scmp.ne.s32.totalorder %s141, %s142
      %p151 = scmp.eq.s32.totalorder %s26, 0
      %p152 = por %p150, %p151
      %p153 = scmp.ne.s32.totalorder %s141, %s142
      %p154 = scmp.eq.s32.totalorder %s27, 1
      %p155 = por %p153, %p154
      %p157 = scmp.ne.s32.totalorder %s142, %s156
      %p158 = scmp.eq.s32.totalorder %s27, 0
      %p159 = por %p157, %p158
      %s161 = sadd.s32 %s160, 1
      %p164 = scmp.eq.s32.totalorder %s21, 1
      %p165 = scmp.ne.s32.totalorder %s160, %s162
      %p166 = scmp.eq.s32.totalorder %s21, 0
      %p167 = por %p165, %p166
      %p168 = scmp.ne.s32.totalorder %s160, %s162
      %p169 = scmp.eq.s32.totalorder %s26, 1
      %p170 = por %p168, %p169
      %p171 = scmp.ne.s32.totalorder %s162, %s163
      %p172 = scmp.eq.s32.totalorder %s26, 0
      %p173 = por %p171, %p172
      %p174 = scmp.ne.s32.totalorder %s162, %s163
      %p175 = scmp.eq.s32.totalorder %s27, 1
      %p176 = por %p174, %p175
      %p178 = scmp.ne.s32.totalorder %s163, %s177
      %p179 = scmp.eq.s32.totalorder %s27, 0
      %p180 = por %p178, %p179
      %s182 = sadd.s32 %s181, 1
      %p185 = scmp.eq.s32.totalorder %s21, 1
      %p186 = scmp.ne.s32.totalorder %s181, %s183
      %p187 = scmp.eq.s32.totalorder %s21, 0
      %p188 = por %p186, %p187
      %p189 = scmp.ne.s32.totalorder %s181, %s183
      %p190 = scmp.eq.s32.totalorder %s26, 1
      %p191 = por %p189, %p190
      %p192 = scmp.ne.s32.totalorder %s183, %s184
      %p193 = scmp.eq.s32.totalorder %s26, 0
      %p194 = por %p192, %p193
      %p195 = scmp.ne.s32.totalorder %s183, %s184
      %p196 = scmp.eq.s32.totalorder %s27, 1
      %p197 = por %p195, %p196
      %p199 = scmp.ne.s32.totalorder %s184, %s198
      %p200 = scmp.eq.s32.totalorder %s27, 0
      %p201 = por %p199, %p200
      %s203 = sadd.s32 %s202, 1
      %p206 = scmp.eq.s32.totalorder %s21, 1
      %p207 = scmp.ne.s32.totalorder %s202, %s204
      %p208 = scmp.eq.s32.totalorder %s21, 0
      %p209 = por %p207, %p208
      %p210 = scmp.ne.s32.totalorder %s202, %s204
      %p211 = scmp.eq.s32.totalorder %s26, 1
      %p212 = por %p210, %p211
      %p213 = scmp.ne.s32.totalorder %s204, %s205
      %p214 = scmp.eq.s32.totalorder %s26, 0
      %p215 = por %p213, %p214
      %p216 = scmp.ne.s32.totalorder %s204, %s205
      %p217 = scmp.eq.s32.totalorder %s27, 1
      %p218 = por %p216, %p217
      %p220 = scmp.ne.s32.totalorder %s205, %s219
      %p221 = scmp.eq.s32.totalorder %s27, 0
      %p222 = por %p220, %p221
      %s224 = sadd.s32 %s223, 1
      %p227 = scmp.eq.s32.totalorder %s21, 1
      %p228 = scmp.ne.s32.totalorder %s223, %s225
      %p229 = scmp.eq.s32.totalorder %s21, 0
      %p230 = por %p228, %p229
      %p231 = scmp.ne.s32.totalorder %s223, %s225
      %p232 = scmp.eq.s32.totalorder %s26, 1
      %p233 = por %p231, %p232
      %p234 = scmp.ne.s32.totalorder %s225, %s226
      %p235 = scmp.eq.s32.totalorder %s26, 0
      %p236 = por %p234, %p235
      %p237 = scmp.ne.s32.totalorder %s225, %s226
      %p238 = scmp.eq.s32.totalorder %s27, 1
      %p239 = por %p237, %p238
      %p241 = scmp.ne.s32.totalorder %s226, %s240
      %p242 = scmp.eq.s32.totalorder %s27, 0
      %p243 = por %p241, %p242
      %s245 = sadd.s32 %s244, 1
      %p248 = scmp.eq.s32.totalorder %s21, 1
      %p249 = scmp.ne.s32.totalorder %s244, %s246
      %p250 = scmp.eq.s32.totalorder %s21, 0
      %p251 = por %p249, %p250
      %p252 = scmp.ne.s32.totalorder %s244, %s246
      %p253 = scmp.eq.s32.totalorder %s26, 1
      %p254 = por %p252, %p253
      %p255 = scmp.ne.s32.totalorder %s246, %s247
      %p256 = scmp.eq.s32.totalorder %s26, 0
      %p257 = por %p255, %p256
      %p258 = scmp.ne.s32.totalorder %s246, %s247
      %p259 = scmp.eq.s32.totalorder %s27, 1
      %p260 = por %p258, %p259
      %p262 = scmp.ne.s32.totalorder %s247, %s261
      %p263 = scmp.eq.s32.totalorder %s27, 0
      %p264 = por %p262, %p263
      %s266 = sadd.s32 %s265, 1
      %p269 = scmp.eq.s32.totalorder %s21, 1
      %p270 = scmp.ne.s32.totalorder %s265, %s267
      %p271 = scmp.eq.s32.totalorder %s21, 0
      %p272 = por %p270, %p271
      %p273 = scmp.ne.s32.totalorder %s265, %s267
      %p274 = scmp.eq.s32.totalorder %s26, 1
      %p275 = por %p273, %p274
      %p276 = scmp.ne.s32.totalorder %s267, %s268
      %p277 = scmp.eq.s32.totalorder %s26, 0
      %p278 = por %p276, %p277
      %p279 = scmp.ne.s32.totalorder %s267, %s268
      %p280 = scmp.eq.s32.totalorder %s27, 1
      %p281 = por %p279, %p280
      %p283 = scmp.ne.s32.totalorder %s268, %s282
      %p284 = scmp.eq.s32.totalorder %s27, 0
      %p285 = por %p283, %p284
      %s286 = ssub.s32 %s21, %s28
      %p287 = scmp.eq.s32.totalorder %s286, 0
      %s289 = sadd.s32 %s288, 1
      %s290 = scalar_select %p287, %s288, %s289
      %p293 = pneg %p287
      %p294 = scmp.eq.s32.totalorder %s21, 1
      %p295 = por %p293, %p294
      %p296 = scmp.ne.s32.totalorder %s288, %s291
      %p297 = scmp.eq.s32.totalorder %s21, 0
      %p298 = por %p296, %p297
      %p299 = scmp.ne.s32.totalorder %s288, %s291
      %p300 = scmp.eq.s32.totalorder %s26, 1
      %p301 = por %p299, %p300
      %p302 = scmp.ne.s32.totalorder %s291, %s292
      %p303 = scmp.eq.s32.totalorder %s26, 0
      %p304 = por %p302, %p303
      %p305 = scmp.ne.s32.totalorder %s291, %s292
      %p306 = scmp.eq.s32.totalorder %s27, 1
      %p307 = por %p305, %p306
      %p309 = scmp.ne.s32.totalorder %s292, %s308
      %p310 = scmp.eq.s32.totalorder %s27, 0
      %p311 = por %p309, %p310
      %p312 = scmp.le.s32.totalorder 1, %s21
      %p313 = scmp.lt.s32.totalorder %s21, 3
      %p314 = pnand %p312, %p313
      %p315 = pneg %p314
      // Predicated region
      $region9: #{tpu_custom_call.1} parent=5 // pred_check
        _
      $region10: #{tpu_custom_call.1} parent=5 // pred_check_branch
        %317 = sbr.rel (%p314) target = $region12
      $region11: #{tpu_custom_call.1} parent=5 // pred_region
        %s318 = ssub.s32 %s21, 1
        // Predicated region
        $region13: #{tpu_custom_call.1} parent=11 // pred_check
          %p319 = pneg %p68
        $region14: #{tpu_custom_call.1} parent=11 // pred_check_branch
          %321 = sbr.rel (%p319) target = $region16
        $region15: #{tpu_custom_call.1} parent=11 // pred_region
          _
        $region16: #{tpu_custom_call.1} parent=11 // pred_fallthru
          _
        // Predicated region
        $region17: #{tpu_custom_call.1} parent=11 // pred_check
          %p322 = pneg %p89
        $region18: #{tpu_custom_call.1} parent=11 // pred_check_branch
          %324 = sbr.rel (%p322) target = $region20
        $region19: #{tpu_custom_call.1} parent=11 // pred_region
          _
        $region20: #{tpu_custom_call.1} parent=11 // pred_fallthru
          _
        // Predicated region
        $region21: #{tpu_custom_call.1} parent=11 // pred_check
          %p325 = pneg %p110
        $region22: #{tpu_custom_call.1} parent=11 // pred_check_branch
          %327 = sbr.rel (%p325) target = $region24
        $region23: #{tpu_custom_call.1} parent=11 // pred_region
          _
        $region24: #{tpu_custom_call.1} parent=11 // pred_fallthru
          _
        // Predicated region
        $region25: #{tpu_custom_call.1} parent=11 // pred_check
          %p328 = pneg %p131
        $region26: #{tpu_custom_call.1} parent=11 // pred_check_branch
          %330 = sbr.rel (%p328) target = $region28
        $region27: #{tpu_custom_call.1} parent=11 // pred_region
          _
        $region28: #{tpu_custom_call.1} parent=11 // pred_fallthru
          _
        // Predicated region
        $region29: #{tpu_custom_call.1} parent=11 // pred_check
          %p331 = pneg %p152
        $region30: #{tpu_custom_call.1} parent=11 // pred_check_branch
          %333 = sbr.rel (%p331) target = $region32
        $region31: #{tpu_custom_call.1} parent=11 // pred_region
          _
        $region32: #{tpu_custom_call.1} parent=11 // pred_fallthru
          _
        // Predicated region
        $region33: #{tpu_custom_call.1} parent=11 // pred_check
          %p334 = pneg %p173
        $region34: #{tpu_custom_call.1} parent=11 // pred_check_branch
          %336 = sbr.rel (%p334) target = $region36
        $region35: #{tpu_custom_call.1} parent=11 // pred_region
          _
        $region36: #{tpu_custom_call.1} parent=11 // pred_fallthru
          _
        // Predicated region
        $region37: #{tpu_custom_call.1} parent=11 // pred_check
          %p337 = pneg %p194
        $region38: #{tpu_custom_call.1} parent=11 // pred_check_branch
          %339 = sbr.rel (%p337) target = $region40
        $region39: #{tpu_custom_call.1} parent=11 // pred_region
          _
        $region40: #{tpu_custom_call.1} parent=11 // pred_fallthru
          _
        // Predicated region
        $region41: #{tpu_custom_call.1} parent=11 // pred_check
          %p340 = pneg %p215
        $region42: #{tpu_custom_call.1} parent=11 // pred_check_branch
          %342 = sbr.rel (%p340) target = $region44
        $region43: #{tpu_custom_call.1} parent=11 // pred_region
          _
        $region44: #{tpu_custom_call.1} parent=11 // pred_fallthru
          _
        // Predicated region
        $region45: #{tpu_custom_call.1} parent=11 // pred_check
          %p343 = pneg %p236
        $region46: #{tpu_custom_call.1} parent=11 // pred_check_branch
          %345 = sbr.rel (%p343) target = $region48
        $region47: #{tpu_custom_call.1} parent=11 // pred_region
          _
        $region48: #{tpu_custom_call.1} parent=11 // pred_fallthru
          _
        // Predicated region
        $region49: #{tpu_custom_call.1} parent=11 // pred_check
          %p346 = pneg %p257
        $region50: #{tpu_custom_call.1} parent=11 // pred_check_branch
          %348 = sbr.rel (%p346) target = $region52
        $region51: #{tpu_custom_call.1} parent=11 // pred_region
          _
        $region52: #{tpu_custom_call.1} parent=11 // pred_fallthru
          _
        // Predicated region
        $region53: #{tpu_custom_call.1} parent=11 // pred_check
          %p349 = pneg %p278
        $region54: #{tpu_custom_call.1} parent=11 // pred_check_branch
          %351 = sbr.rel (%p349) target = $region56
        $region55: #{tpu_custom_call.1} parent=11 // pred_region
          _
        $region56: #{tpu_custom_call.1} parent=11 // pred_fallthru
          _
      $region12: #{tpu_custom_call.1} parent=5 // pred_fallthru
        _
      %p352 = scmp.lt.s32.totalorder %s21, 2
      // Predicated region
      $region57: #{tpu_custom_call.1} parent=5 // pred_check
        %p353 = pneg %p352
      $region58: #{tpu_custom_call.1} parent=5 // pred_check_branch
        %355 = sbr.rel (%p353) target = $region60
      $region59: #{tpu_custom_call.1} parent=5 // pred_region
        // Predicated region
        $region61: #{tpu_custom_call.1} parent=59 // pred_check
          %p356 = pneg %p41
        $region62: #{tpu_custom_call.1} parent=59 // pred_check_branch
          %358 = sbr.rel (%p356) target = $region64
        $region63: #{tpu_custom_call.1} parent=59 // pred_region
          %p359 = scmp.lt.s32.totalorder %s21, 1
          %s360 = scalar_select %p359, %s21, 1
          %s361 = smul.addr %s360, 4
          %s362 = smul.addr %s361, 8
          %s363 = scalar_lea.vmem %s0, %s362
        $region64: #{tpu_custom_call.1} parent=59 // pred_fallthru
          _
      $region60: #{tpu_custom_call.1} parent=5 // pred_fallthru
        _
      %p364 = scmp.le.s32.totalorder 1, %s21
      %p365 = scmp.lt.s32.totalorder %s21, 3
      %p366 = pnand %p364, %p365
      %p367 = pneg %p366
      // Predicated region
      $region65: #{tpu_custom_call.1} parent=5 // pred_check
        _
      $region66: #{tpu_custom_call.1} parent=5 // pred_check_branch
        %369 = sbr.rel (%p366) target = $region68
      $region67: #{tpu_custom_call.1} parent=5 // pred_region
        %s370 = ssub.s32 %s21, 1
        %p371 = scmp.lt.s32.totalorder %s26, 1
        %s372 = scalar_select %p371, %s26, 1
        %s373 = smul.addr %s372, 4
        %s374 = smul.addr %s373, 8
        %s375 = scalar_lea.vmem %s0, %s374
        %p376 = pneg %p47
        %p377 = pneg %p44
        %p378 = pneg %p68
        %p379 = pneg %p65
        %p380 = pneg %p89
        %p381 = pneg %p86
        %p382 = pneg %p110
        %p383 = pneg %p107
        %p384 = pneg %p131
        %p385 = pneg %p128
        %p386 = pneg %p152
        %p387 = pneg %p149
        %p388 = pneg %p173
        %p389 = pneg %p170
        %p390 = pneg %p194
        %p391 = pneg %p191
        %p392 = pneg %p215
        %p393 = pneg %p212
        %p394 = pneg %p236
        %p395 = pneg %p233
        %p396 = pneg %p257
        %p397 = pneg %p254
        %p398 = pneg %p278
        %p399 = pneg %p275
        %p400 = pneg %p304
        %p401 = pneg %p301
        %s402 = sand.u32 %s291, 1
        %s403 = scalar_lea.sflag [#allocation3], %s402
        %s404 = sand.u32 %s291, 1
        %s405 = smul.addr %s404, 32
        %s406 = scalar_lea.vmem [#allocation2], %s405
        %p407 = scmp.lt.s32.totalorder %s26, 1
        %s408 = scalar_select %p407, %s26, 1
        %s409 = smul.addr %s408, 4
        %s410 = smul.addr %s409, 8
        %s411 = scalar_lea.vmem %s0, %s410
        %v412 = vld [vmem:[%s411] sm:$0xff]
        %v413 = vld [vmem:[%s411 + $0x8] sm:$0xff]
        %v414 = vld [vmem:[%s411 + $0x10] sm:$0xff]
        %v415 = vld [vmem:[%s411 + $0x18] sm:$0xff]
        %v416 = vld [vmem:[%s1] sm:$0xff]
        %v417 = vld [vmem:[%s1 + $0x8] sm:$0xff]
        %v418 = vld [vmem:[%s1 + $0x10] sm:$0xff]
        %v419 = vld [vmem:[%s1 + $0x18] sm:$0xff]
        %v420 = vld [vmem:[%s2] sm:$0xff]
        %v421 = vld [vmem:[%s2 + $0x8] sm:$0xff]
        %v422 = vld [vmem:[%s2 + $0x10] sm:$0xff]
        %v423 = vld [vmem:[%s2 + $0x18] sm:$0xff]
        %vm424 = vcmask 523264
        %v425 = vsel %vm424, %v412, 0.0
        %v426 = vsel %vm424, %v413, 0.0
        %v427 = vadd.f32 %v425, %v426
        %v428 = vsel %vm424, %v414, 0.0
        %v429 = vadd.f32 %v427, %v428
        %v430 = vsel %vm424, %v415, 0.0
        %v431 = vadd.f32 %v429, %v430
        %v432 = vrot.slane %v431, 4
        %v433 = vadd.f32 %v431, %v432
        %v434 = vrot.slane %v433, 2
        %v435 = vadd.f32 %v433, %v434
        %v436 = vrot.slane %v435, 1
        %v437 = vadd.f32 %v435, %v436
        %v438 = vrcp.pop 32.0
        %v439 = vmul.f32 %v437, %v438
        %v440 = vsub.f32 %v412, %v439
        %v441 = vsub.f32 %v413, %v439
        %v442 = vsub.f32 %v414, %v439
        %v443 = vsub.f32 %v415, %v439
        %v444 = vmul.f32 %v440, %v440
        %v445 = vmul.f32 %v441, %v441
        %v446 = vmul.f32 %v442, %v442
        %v447 = vmul.f32 %v443, %v443
        %v448 = vsel %vm424, %v444, 0.0
        %v449 = vsel %vm424, %v445, 0.0
        %v450 = vadd.f32 %v448, %v449
        %v451 = vsel %vm424, %v446, 0.0
        %v452 = vadd.f32 %v450, %v451
        %v453 = vsel %vm424, %v447, 0.0
        %v454 = vadd.f32 %v452, %v453
        %v455 = vrot.slane %v454, 4
        %v456 = vadd.f32 %v454, %v455
        %v457 = vrot.slane %v456, 2
        %v458 = vadd.f32 %v456, %v457
        %v459 = vrot.slane %v458, 1
        %v460 = vadd.f32 %v458, %v459
        %v461 = vmul.f32 %v460, %v438
        %v462 = vadd.f32 %v461, 1e-05
        %v463 = vrsqrt.pop %v462
        %v464 = vmul.f32 %v440, %v463
        %v465 = vmul.f32 %v441, %v463
        %v466 = vmul.f32 %v442, %v463
        %v467 = vmul.f32 %v443, %v463
        %469 = vset.pattern.permute.xlu0 0
        %470 = vperm.xlu0 %469, %v416
        %v471 = vpop.permute.xlu0 %470
        %474 = vset.pattern.permute.xlu0 0
        %475 = vperm.xlu0 %474, %v417
        %v476 = vpop.permute.xlu0 %475
        %479 = vset.pattern.permute.xlu0 0
        %480 = vperm.xlu0 %479, %v418
        %v481 = vpop.permute.xlu0 %480
        %484 = vset.pattern.permute.xlu0 0
        %485 = vperm.xlu0 %484, %v419
        %v486 = vpop.permute.xlu0 %485
        %v488 = vmul.f32 %v464, %v471
        %v489 = vmul.f32 %v465, %v476
        %v490 = vmul.f32 %v466, %v481
        %v491 = vmul.f32 %v467, %v486
        %493 = vset.pattern.permute.xlu0 0
        %494 = vperm.xlu0 %493, %v420
        %v495 = vpop.permute.xlu0 %494
        %498 = vset.pattern.permute.xlu0 0
        %499 = vperm.xlu0 %498, %v421
        %v500 = vpop.permute.xlu0 %499
        %503 = vset.pattern.permute.xlu0 0
        %504 = vperm.xlu0 %503, %v422
        %v505 = vpop.permute.xlu0 %504
        %508 = vset.pattern.permute.xlu0 0
        %509 = vperm.xlu0 %508, %v423
        %v510 = vpop.permute.xlu0 %509
        %v512 = vadd.f32 %v488, %v495
        %v513 = vadd.f32 %v489, %v500
        %v514 = vadd.f32 %v490, %v505
        %v515 = vadd.f32 %v491, %v510
        %v516 = vld [vmem:[%s3] sm:$0xff]
        %v517 = vld [vmem:[%s3 + $0x8] sm:$0xff]
        %v518 = vld [vmem:[%s3 + $0x10] sm:$0xff]
        %v519 = vld [vmem:[%s3 + $0x18] sm:$0xff]
        %v520 = vld [vmem:[%s3 + $0x20] sm:$0xff]
        %v521 = vld [vmem:[%s3 + $0x28] sm:$0xff]
        %v522 = vld [vmem:[%s3 + $0x30] sm:$0xff]
        %v523 = vld [vmem:[%s3 + $0x38] sm:$0xff]
        %v524 = vld [vmem:[%s3 + $0x40] sm:$0xff]
        %v525 = vld [vmem:[%s3 + $0x48] sm:$0xff]
        %v526 = vld [vmem:[%s3 + $0x50] sm:$0xff]
        %v527 = vld [vmem:[%s3 + $0x58] sm:$0xff]
        %vm528 = vcmask 261120
        %v530 = vsel %vm528, %v516, 0
        %v533 = vsel %vm528, %v517, 0
        %v536 = vsel %vm528, %v518, 0
        %v539 = vsel %vm528, %v519, 0
        %v542 = vsel %vm528, %v520, 0
        %v545 = vsel %vm528, %v521, 0
        %v548 = vsel %vm528, %v522, 0
        %v551 = vsel %vm528, %v523, 0
        %v554 = vsel %vm528, %v524, 0
        %v557 = vsel %vm528, %v525, 0
        %v560 = vsel %vm528, %v526, 0
        %v563 = vsel %vm528, %v527, 0
        %565 = vmatprep.subr.mxu0 0.0
        %566 = vmatpush1.msra.mxu0 %v512
        %567 = vmatprep.subr.mxu0 0.0
        %568 = vmatpush1.msra.mxu0 %v513
        %569 = vmatprep.subr.mxu0 0.0
        %570 = vmatpush1.msra.mxu0 %v514
        %571 = vmatprep.subr.mxu0 0.0
        %572 = vmatpush1.msra.mxu0 %v515
        %573 = vmatprep.subr.mxu0 0.0
        %574 = vmatpush1.msra.mxu0 0.0
        %575 = vmatprep.subr.mxu0 0.0
        %576 = vmatpush1.msra.mxu0 0.0
        %577 = vmatprep.subr.mxu0 0.0
        %578 = vmatpush1.msra.mxu0 0.0
        %579 = vmatprep.subr.mxu0 0.0
        %580 = vmatpush1.msra.mxu0 0.0
        %581 = vmatprep.subr.mxu0 0.0
        %582 = vmatpush1.msra.mxu0 0.0
        %583 = vmatprep.subr.mxu0 0.0
        %584 = vmatpush1.msra.mxu0 0.0
        %585 = vmatprep.subr.mxu0 0.0
        %586 = vmatpush1.msra.mxu0 0.0
        %587 = vmatprep.subr.mxu0 0.0
        %588 = vmatpush1.msra.mxu0 0.0
        %589 = vmatprep.subr.mxu0 0.0
        %590 = vmatpush1.msra.mxu0 0.0
        %591 = vmatprep.subr.mxu0 0.0
        %592 = vmatpush1.msra.mxu0 0.0
        %593 = vmatprep.subr.mxu0 0.0
        %594 = vmatpush1.msra.mxu0 0.0
        %595 = vmatprep.subr.mxu0 0.0
        %596 = vmatpush1.msra.mxu0 0.0
        %597 = vmatprep.subr.mxu0 0.0
        %598 = vmatpush1.msra.mxu0 0.0
        %599 = vmatprep.subr.mxu0 0.0
        %600 = vmatpush1.msra.mxu0 0.0
        %601 = vmatprep.subr.mxu0 0.0
        %602 = vmatpush1.msra.mxu0 0.0
        %603 = vmatprep.subr.mxu0 0.0
        %604 = vmatpush1.msra.mxu0 0.0
        %605 = vmatprep.subr.mxu0 0.0
        %606 = vmatpush1.msra.mxu0 0.0
        %607 = vmatprep.subr.mxu0 0.0
        %608 = vmatpush1.msra.mxu0 0.0
        %609 = vmatprep.subr.mxu0 0.0
        %610 = vmatpush1.msra.mxu0 0.0
        %611 = vmatprep.subr.mxu0 0.0
        %612 = vmatpush1.msra.mxu0 0.0
        %613 = vmatprep.subr.mxu0 0.0
        %614 = vmatpush1.msra.mxu0 0.0
        %615 = vmatprep.subr.mxu0 0.0
        %616 = vmatpush1.msra.mxu0 0.0
        %617 = vmatprep.subr.mxu0 0.0
        %618 = vmatpush1.msra.mxu0 0.0
        %619 = vmatprep.subr.mxu0 0.0
        %620 = vmatpush1.msra.mxu0 0.0
        %621 = vmatprep.subr.mxu0 0.0
        %622 = vmatpush1.msra.mxu0 0.0
        %623 = vmatprep.subr.mxu0 0.0
        %624 = vmatpush1.msra.mxu0 0.0
        %625 = vmatprep.subr.mxu0 0.0
        %626 = vmatpush1.msra.mxu0 0.0
        %627 = vmatprep.subr.mxu0 0.0
        %628 = vmatpush1.msra.mxu0 0.0
        %629 = vmatprep.mubr.f32.mxu0 0.0
        %630 = vmatmul.mubr.f32.gmra.mrb[0].mxu0 %v530
        %v631 = vpop.f32.mrb[0].mxu0
        %v632 = vadd.f32 0.0, %v631
        %v633 = vpop.f32.mrb[0].mxu0
        %634 = vmatprep.mubr.f32.mxu0 0.0
        %635 = vmatmul.mubr.f32.gmra.mrb[0].mxu0 %v533
        %v636 = vpop.f32.mrb[0].mxu0
        %v637 = vadd.f32 0.0, %v636
        %v638 = vpop.f32.mrb[0].mxu0
        %639 = vmatprep.mubr.f32.mxu0 0.0
        %640 = vmatmul.mubr.f32.gmra.mrb[0].mxu0 %v536
        %v641 = vpop.f32.mrb[0].mxu0
        %v642 = vadd.f32 0.0, %v641
        %v643 = vpop.f32.mrb[0].mxu0
        %644 = vmatprep.mubr.f32.mxu0 0.0
        %645 = vmatmul.mubr.f32.gmra.mrb[0].mxu0 %v539
        %v646 = vpop.f32.mrb[0].mxu0
        %v647 = vadd.f32 0.0, %v646
        %v648 = vpop.f32.mrb[0].mxu0
        %649 = vmatprep.mubr.f32.mxu0 0.0
        %650 = vmatmul.mubr.f32.gmra.mrb[0].mxu0 %v542
        %v651 = vpop.f32.mrb[0].mxu0
        %v652 = vadd.f32 0.0, %v651
        %v653 = vpop.f32.mrb[0].mxu0
        %654 = vmatprep.mubr.f32.mxu0 0.0
        %655 = vmatmul.mubr.f32.gmra.mrb[0].mxu0 %v545
        %v656 = vpop.f32.mrb[0].mxu0
        %v657 = vadd.f32 0.0, %v656
        %v658 = vpop.f32.mrb[0].mxu0
        %659 = vmatprep.mubr.f32.mxu0 0.0
        %660 = vmatmul.mubr.f32.gmra.mrb[0].mxu0 %v548
        %v661 = vpop.f32.mrb[0].mxu0
        %v662 = vadd.f32 0.0, %v661
        %v663 = vpop.f32.mrb[0].mxu0
        %664 = vmatprep.mubr.f32.mxu0 0.0
        %665 = vmatmul.mubr.f32.gmra.mrb[0].mxu0 %v551
        %v666 = vpop.f32.mrb[0].mxu0
        %v667 = vadd.f32 0.0, %v666
        %v668 = vpop.f32.mrb[0].mxu0
        %669 = vmatprep.mubr.f32.mxu0 0.0
        %670 = vmatmul.mubr.f32.gmra.mrb[0].mxu0 %v554
        %v671 = vpop.f32.mrb[0].mxu0
        %v672 = vadd.f32 0.0, %v671
        %v673 = vpop.f32.mrb[0].mxu0
        %674 = vmatprep.mubr.f32.mxu0 0.0
        %675 = vmatmul.mubr.f32.gmra.mrb[0].mxu0 %v557
        %v676 = vpop.f32.mrb[0].mxu0
        %v677 = vadd.f32 0.0, %v676
        %v678 = vpop.f32.mrb[0].mxu0
        %679 = vmatprep.mubr.f32.mxu0 0.0
        %680 = vmatmul.mubr.f32.gmra.mrb[0].mxu0 %v560
        %v681 = vpop.f32.mrb[0].mxu0
        %v682 = vadd.f32 0.0, %v681
        %v683 = vpop.f32.mrb[0].mxu0
        %684 = vmatprep.mubr.f32.mxu0 0.0
        %685 = vmatmul.mubr.f32.gmra.mrb[0].mxu0 %v563
        %v686 = vpop.f32.mrb[0].mxu0
        %v687 = vadd.f32 0.0, %v686
        %v688 = vpop.f32.mrb[0].mxu0
        %689 = vdwg.mxu0
        %690 = vxpose.xlu0.b32.start [1/16] %v632, 128
        %691 = vxpose.xlu0.b32.cont [2/16] 0.0, 128
        %692 = vxpose.xlu0.b32.cont [3/16] 0.0, 128
        %693 = vxpose.xlu0.b32.cont [4/16] 0.0, 128
        %694 = vxpose.xlu0.b32.cont [5/16] 0.0, 128
        %695 = vxpose.xlu0.b32.cont [6/16] 0.0, 128
        %696 = vxpose.xlu0.b32.cont [7/16] 0.0, 128
        %697 = vxpose.xlu0.b32.cont [8/16] 0.0, 128
        %698 = vxpose.xlu0.b32.cont [9/16] 0.0, 128
        %699 = vxpose.xlu0.b32.cont [10/16] 0.0, 128
        %700 = vxpose.xlu0.b32.cont [11/16] 0.0, 128
        %701 = vxpose.xlu0.b32.cont [12/16] 0.0, 128
        %702 = vxpose.xlu0.b32.cont [13/16] 0.0, 128
        %703 = vxpose.xlu0.b32.cont [14/16] 0.0, 128
        %704 = vxpose.xlu0.b32.cont [15/16] 0.0, 128
        %705 = vxpose.xlu0.b32.end [16/16] 0.0, 128
        %v706 = vpop.trf.xlu0
        %v707 = vpop.trf.xlu0
        %v708 = vpop.trf.xlu0
        %v709 = vpop.trf.xlu0
        %v710 = vpop.trf.xlu0
        %v711 = vpop.trf.xlu0
        %v712 = vpop.trf.xlu0
        %v713 = vpop.trf.xlu0
        %v714 = vpop.trf.xlu0
        %v715 = vpop.trf.xlu0
        %v716 = vpop.trf.xlu0
        %v717 = vpop.trf.xlu0
        %v718 = vpop.trf.xlu0
        %v719 = vpop.trf.xlu0
        %v720 = vpop.trf.xlu0
        %v721 = vpop.trf.xlu0
        %vm722 = vcmask 64512
        %v724 = vsel %vm722, %v706, 0
        %v727 = vsel %vm722, %v707, 0
        %v730 = vsel %vm722, %v708, 0
        %v733 = vsel %vm722, %v709, 0
        %v736 = vsel %vm722, %v710, 0
        %v739 = vsel %vm722, %v711, 0
        %v742 = vsel %vm722, %v712, 0
        %v745 = vsel %vm722, %v713, 0
        %747 = vmatprep.subr.mxu0 0.0
        %748 = vmatpush1.msra.mxu0 %v652
        %749 = vmatprep.subr.mxu0 0.0
        %750 = vmatpush1.msra.mxu0 0.0
        %751 = vmatprep.subr.mxu0 0.0
        %752 = vmatpush1.msra.mxu0 0.0
        %753 = vmatprep.subr.mxu0 0.0
        %754 = vmatpush1.msra.mxu0 0.0
        %755 = vmatprep.subr.mxu0 0.0
        %756 = vmatpush1.msra.mxu0 0.0
        %757 = vmatprep.subr.mxu0 0.0
        %758 = vmatpush1.msra.mxu0 0.0
        %759 = vmatprep.subr.mxu0 0.0
        %760 = vmatpush1.msra.mxu0 0.0
        %761 = vmatprep.subr.mxu0 0.0
        %762 = vmatpush1.msra.mxu0 0.0
        %763 = vmatprep.subr.mxu0 0.0
        %764 = vmatpush1.msra.mxu0 0.0
        %765 = vmatprep.subr.mxu0 0.0
        %766 = vmatpush1.msra.mxu0 0.0
        %767 = vmatprep.subr.mxu0 0.0
        %768 = vmatpush1.msra.mxu0 0.0
        %769 = vmatprep.subr.mxu0 0.0
        %770 = vmatpush1.msra.mxu0 0.0
        %771 = vmatprep.subr.mxu0 0.0
        %772 = vmatpush1.msra.mxu0 0.0
        %773 = vmatprep.subr.mxu0 0.0
        %774 = vmatpush1.msra.mxu0 0.0
        %775 = vmatprep.subr.mxu0 0.0
        %776 = vmatpush1.msra.mxu0 0.0
        %777 = vmatprep.subr.mxu0 0.0
        %778 = vmatpush1.msra.mxu0 0.0
        %779 = vmatprep.subr.mxu0 0.0
        %780 = vmatpush1.msra.mxu0 0.0
        %781 = vmatprep.subr.mxu0 0.0
        %782 = vmatpush1.msra.mxu0 0.0
        %783 = vmatprep.subr.mxu0 0.0
        %784 = vmatpush1.msra.mxu0 0.0
        %785 = vmatprep.subr.mxu0 0.0
        %786 = vmatpush1.msra.mxu0 0.0
        %787 = vmatprep.subr.mxu0 0.0
        %788 = vmatpush1.msra.mxu0 0.0
        %789 = vmatprep.subr.mxu0 0.0
        %790 = vmatpush1.msra.mxu0 0.0
        %791 = vmatprep.subr.mxu0 0.0
        %792 = vmatpush1.msra.mxu0 0.0
        %793 = vmatprep.subr.mxu0 0.0
        %794 = vmatpush1.msra.mxu0 0.0
        %795 = vmatprep.subr.mxu0 0.0
        %796 = vmatpush1.msra.mxu0 0.0
        %797 = vmatprep.subr.mxu0 0.0
        %798 = vmatpush1.msra.mxu0 0.0
        %799 = vmatprep.subr.mxu0 0.0
        %800 = vmatpush1.msra.mxu0 0.0
        %801 = vmatprep.subr.mxu0 0.0
        %802 = vmatpush1.msra.mxu0 0.0
        %803 = vmatprep.subr.mxu0 0.0
        %804 = vmatpush1.msra.mxu0 0.0
        %805 = vmatprep.subr.mxu0 0.0
        %806 = vmatpush1.msra.mxu0 0.0
        %807 = vmatprep.subr.mxu0 0.0
        %808 = vmatpush1.msra.mxu0 0.0
        %809 = vmatprep.subr.mxu0 0.0
        %810 = vmatpush1.msra.mxu0 0.0
        %811 = vmatprep.mubr.f32.mxu0 0.0
        %812 = vmatmul.mubr.f32.gmra.mrb[0].mxu0 %v724
        %v813 = vpop.f32.mrb[0].mxu0
        %v814 = vadd.f32 0.0, %v813
        %v815 = vpop.f32.mrb[0].mxu0
        %816 = vmatprep.mubr.f32.mxu0 0.0
        %817 = vmatmul.mubr.f32.gmra.mrb[0].mxu0 %v727
        %v818 = vpop.f32.mrb[0].mxu0
        %v819 = vadd.f32 0.0, %v818
        %v820 = vpop.f32.mrb[0].mxu0
        %821 = vmatprep.mubr.f32.mxu0 0.0
        %822 = vmatmul.mubr.f32.gmra.mrb[0].mxu0 %v730
        %v823 = vpop.f32.mrb[0].mxu0
        %v824 = vadd.f32 0.0, %v823
        %v825 = vpop.f32.mrb[0].mxu0
        %826 = vmatprep.mubr.f32.mxu0 0.0
        %827 = vmatmul.mubr.f32.gmra.mrb[0].mxu0 %v733
        %v828 = vpop.f32.mrb[0].mxu0
        %v829 = vadd.f32 0.0, %v828
        %v830 = vpop.f32.mrb[0].mxu0
        %831 = vmatprep.mubr.f32.mxu0 0.0
        %832 = vmatmul.mubr.f32.gmra.mrb[0].mxu0 %v736
        %v833 = vpop.f32.mrb[0].mxu0
        %v834 = vadd.f32 0.0, %v833
        %v835 = vpop.f32.mrb[0].mxu0
        %836 = vmatprep.mubr.f32.mxu0 0.0
        %837 = vmatmul.mubr.f32.gmra.mrb[0].mxu0 %v739
        %v838 = vpop.f32.mrb[0].mxu0
        %v839 = vadd.f32 0.0, %v838
        %v840 = vpop.f32.mrb[0].mxu0
        %841 = vmatprep.mubr.f32.mxu0 0.0
        %842 = vmatmul.mubr.f32.gmra.mrb[0].mxu0 %v742
        %v843 = vpop.f32.mrb[0].mxu0
        %v844 = vadd.f32 0.0, %v843
        %v845 = vpop.f32.mrb[0].mxu0
        %846 = vmatprep.mubr.f32.mxu0 0.0
        %847 = vmatmul.mubr.f32.gmra.mrb[0].mxu0 %v745
        %v848 = vpop.f32.mrb[0].mxu0
        %v849 = vadd.f32 0.0, %v848
        %v850 = vpop.f32.mrb[0].mxu0
        %851 = vdwg.mxu0
        %v852 = vmul.f32 %v814, 0.35355338
        %v853 = vmul.f32 %v819, 0.35355338
        %v854 = vmul.f32 %v824, 0.35355338
        %v855 = vmul.f32 %v829, 0.35355338
        %v856 = vmul.f32 %v834, 0.35355338
        %v857 = vmul.f32 %v839, 0.35355338
        %v858 = vmul.f32 %v844, 0.35355338
        %v859 = vmul.f32 %v849, 0.35355338
        %v860 = vsel %vm424, %v852, -inf
        %861 = vmax.xlane.f32.xlu0 %v860
        %v862 = vpop.xlane.xlu0 %861
        %v863 = vsel %vm424, %v853, -inf
        %864 = vmax.xlane.f32.xlu0 %v863
        %v865 = vpop.xlane.xlu0 %864
        %v866 = vsel %vm424, %v854, -inf
        %867 = vmax.xlane.f32.xlu0 %v866
        %v868 = vpop.xlane.xlu0 %867
        %v869 = vsel %vm424, %v855, -inf
        %870 = vmax.xlane.f32.xlu0 %v869
        %v871 = vpop.xlane.xlu0 %870
        %v872 = vsel %vm424, %v856, -inf
        %873 = vmax.xlane.f32.xlu0 %v872
        %v874 = vpop.xlane.xlu0 %873
        %v875 = vsel %vm424, %v857, -inf
        %876 = vmax.xlane.f32.xlu0 %v875
        %v877 = vpop.xlane.xlu0 %876
        %v878 = vsel %vm424, %v858, -inf
        %879 = vmax.xlane.f32.xlu0 %v878
        %v880 = vpop.xlane.xlu0 %879
        %v881 = vsel %vm424, %v859, -inf
        %882 = vmax.xlane.f32.xlu0 %v881
        %v883 = vpop.xlane.xlu0 %882
        %v884 = vsub.f32 %v852, %v862
        %v885 = vsub.f32 %v853, %v865
        %v886 = vsub.f32 %v854, %v868
        %v887 = vsub.f32 %v855, %v871
        %v888 = vsub.f32 %v856, %v874
        %v889 = vsub.f32 %v857, %v877
        %v890 = vsub.f32 %v858, %v880
        %v891 = vsub.f32 %v859, %v883
        %v892 = vmul.f32 %v884, 1.442695
        %v893 = vpow.pop %v892
        %v894 = vmul.f32 %v885, 1.442695
        %v895 = vpow.pop %v894
        %v896 = vmul.f32 %v886, 1.442695
        %v897 = vpow.pop %v896
        %v898 = vmul.f32 %v887, 1.442695
        %v899 = vpow.pop %v898
        %v900 = vmul.f32 %v888, 1.442695
        %v901 = vpow.pop %v900
        %v902 = vmul.f32 %v889, 1.442695
        %v903 = vpow.pop %v902
        %v904 = vmul.f32 %v890, 1.442695
        %v905 = vpow.pop %v904
        %v906 = vmul.f32 %v891, 1.442695
        %v907 = vpow.pop %v906
        %v908 = vsel %vm424, %v893, 0.0
        %909 = vadd.xlane.f32.xlu0 %v908
        %v910 = vpop.xlane.xlu0 %909
        %v911 = vsel %vm424, %v895, 0.0
        %912 = vadd.xlane.f32.xlu0 %v911
        %v913 = vpop.xlane.xlu0 %912
        %v914 = vsel %vm424, %v897, 0.0
        %915 = vadd.xlane.f32.xlu0 %v914
        %v916 = vpop.xlane.xlu0 %915
        %v917 = vsel %vm424, %v899, 0.0
        %918 = vadd.xlane.f32.xlu0 %v917
        %v919 = vpop.xlane.xlu0 %918
        %v920 = vsel %vm424, %v901, 0.0
        %921 = vadd.xlane.f32.xlu0 %v920
        %v922 = vpop.xlane.xlu0 %921
        %v923 = vsel %vm424, %v903, 0.0
        %924 = vadd.xlane.f32.xlu0 %v923
        %v925 = vpop.xlane.xlu0 %924
        %v926 = vsel %vm424, %v905, 0.0
        %927 = vadd.xlane.f32.xlu0 %v926
        %v928 = vpop.xlane.xlu0 %927
        %v929 = vsel %vm424, %v907, 0.0
        %930 = vadd.xlane.f32.xlu0 %v929
        %v931 = vpop.xlane.xlu0 %930
        %v932 = vrcp.pop %v910
        %v933 = vmul.f32 %v893, %v932
        %v934 = vrcp.pop %v913
        %v935 = vmul.f32 %v895, %v934
        %v936 = vrcp.pop %v916
        %v937 = vmul.f32 %v897, %v936
        %v938 = vrcp.pop %v919
        %v939 = vmul.f32 %v899, %v938
        %v940 = vrcp.pop %v922
        %v941 = vmul.f32 %v901, %v940
        %v942 = vrcp.pop %v925
        %v943 = vmul.f32 %v903, %v942
        %v944 = vrcp.pop %v928
        %v945 = vmul.f32 %v905, %v944
        %v946 = vrcp.pop %v931
        %v947 = vmul.f32 %v907, %v946
        %v949 = vsel %vm424, %v672, 0
        %v952 = vsel %vm424, %v933, 0
        %v955 = vsel %vm424, %v935, 0
        %v958 = vsel %vm424, %v937, 0
        %v961 = vsel %vm424, %v939, 0
        %v964 = vsel %vm424, %v941, 0
        %v967 = vsel %vm424, %v943, 0
        %v970 = vsel %vm424, %v945, 0
        %v973 = vsel %vm424, %v947, 0
        %975 = vmatprep.subr.mxu0 0.0
        %976 = vmatpush1.xpose.msra.mxu0 %v952
        %977 = vmatprep.subr.mxu0 0.0
        %978 = vmatpush1.xpose.msra.mxu0 %v955
        %979 = vmatprep.subr.mxu0 0.0
        %980 = vmatpush1.xpose.msra.mxu0 %v958
        %981 = vmatprep.subr.mxu0 0.0
        %982 = vmatpush1.xpose.msra.mxu0 %v961
        %983 = vmatprep.subr.mxu0 0.0
        %984 = vmatpush1.xpose.msra.mxu0 %v964
        %985 = vmatprep.subr.mxu0 0.0
        %986 = vmatpush1.xpose.msra.mxu0 %v967
        %987 = vmatprep.subr.mxu0 0.0
        %988 = vmatpush1.xpose.msra.mxu0 %v970
        %989 = vmatprep.subr.mxu0 0.0
        %990 = vmatpush1.xpose.msra.mxu0 %v973
        %991 = vmatprep.subr.mxu0 0.0
        %992 = vmatpush1.xpose.msra.mxu0 0.0
        %993 = vmatprep.subr.mxu0 0.0
        %994 = vmatpush1.xpose.msra.mxu0 0.0
        %995 = vmatprep.subr.mxu0 0.0
        %996 = vmatpush1.xpose.msra.mxu0 0.0
        %997 = vmatprep.subr.mxu0 0.0
        %998 = vmatpush1.xpose.msra.mxu0 0.0
        %999 = vmatprep.subr.mxu0 0.0
        %1000 = vmatpush1.xpose.msra.mxu0 0.0
        %1001 = vmatprep.subr.mxu0 0.0
        %1002 = vmatpush1.xpose.msra.mxu0 0.0
        %1003 = vmatprep.subr.mxu0 0.0
        %1004 = vmatpush1.xpose.msra.mxu0 0.0
        %1005 = vmatprep.subr.mxu0 0.0
        %1006 = vmatpush1.xpose.msra.mxu0 0.0
        %1007 = vmatprep.subr.mxu0 0.0
        %1008 = vmatpush1.xpose.msra.mxu0 0.0
        %1009 = vmatprep.subr.mxu0 0.0
        %1010 = vmatpush1.xpose.msra.mxu0 0.0
        %1011 = vmatprep.subr.mxu0 0.0
        %1012 = vmatpush1.xpose.msra.mxu0 0.0
        %1013 = vmatprep.subr.mxu0 0.0
        %1014 = vmatpush1.xpose.msra.mxu0 0.0
        %1015 = vmatprep.subr.mxu0 0.0
        %1016 = vmatpush1.xpose.msra.mxu0 0.0
        %1017 = vmatprep.subr.mxu0 0.0
        %1018 = vmatpush1.xpose.msra.mxu0 0.0
        %1019 = vmatprep.subr.mxu0 0.0
        %1020 = vmatpush1.xpose.msra.mxu0 0.0
        %1021 = vmatprep.subr.mxu0 0.0
        %1022 = vmatpush1.xpose.msra.mxu0 0.0
        %1023 = vmatprep.subr.mxu0 0.0
        %1024 = vmatpush1.xpose.msra.mxu0 0.0
        %1025 = vmatprep.subr.mxu0 0.0
        %1026 = vmatpush1.xpose.msra.mxu0 0.0
        %1027 = vmatprep.subr.mxu0 0.0
        %1028 = vmatpush1.xpose.msra.mxu0 0.0
        %1029 = vmatprep.subr.mxu0 0.0
        %1030 = vmatpush1.xpose.msra.mxu0 0.0
        %1031 = vmatprep.subr.mxu0 0.0
        %1032 = vmatpush1.xpose.msra.mxu0 0.0
        %1033 = vmatprep.subr.mxu0 0.0
        %1034 = vmatpush1.xpose.msra.mxu0 0.0
        %1035 = vmatprep.subr.mxu0 0.0
        %1036 = vmatpush1.xpose.msra.mxu0 0.0
        %1037 = vmatprep.subr.mxu0 0.0
        %1038 = vmatpush1.xpose.msra.mxu0 0.0
        %1039 = vmatprep.mubr.f32.mxu0 0.0
        %1040 = vmatmul.mubr.f32.gmra.mrb[0].mxu0 %v949
        %v1041 = vpop.f32.mrb[0].mxu0
        %v1042 = vadd.f32 0.0, %v1041
        %v1043 = vpop.f32.mrb[0].mxu0
        %1044 = vdwg.mxu0
        %1045 = vxpose.xlu0.b32.start [1/16] %v637, 128
        %1046 = vxpose.xlu0.b32.cont [2/16] 0.0, 128
        %1047 = vxpose.xlu0.b32.cont [3/16] 0.0, 128
        %1048 = vxpose.xlu0.b32.cont [4/16] 0.0, 128
        %1049 = vxpose.xlu0.b32.cont [5/16] 0.0, 128
        %1050 = vxpose.xlu0.b32.cont [6/16] 0.0, 128
        %1051 = vxpose.xlu0.b32.cont [7/16] 0.0, 128
        %1052 = vxpose.xlu0.b32.cont [8/16] 0.0, 128
        %1053 = vxpose.xlu0.b32.cont [9/16] 0.0, 128
        %1054 = vxpose.xlu0.b32.cont [10/16] 0.0, 128
        %1055 = vxpose.xlu0.b32.cont [11/16] 0.0, 128
        %1056 = vxpose.xlu0.b32.cont [12/16] 0.0, 128
        %1057 = vxpose.xlu0.b32.cont [13/16] 0.0, 128
        %1058 = vxpose.xlu0.b32.cont [14/16] 0.0, 128
        %1059 = vxpose.xlu0.b32.cont [15/16] 0.0, 128
        %1060 = vxpose.xlu0.b32.end [16/16] 0.0, 128
        %v1061 = vpop.trf.xlu0
        %v1062 = vpop.trf.xlu0
        %v1063 = vpop.trf.xlu0
        %v1064 = vpop.trf.xlu0
        %v1065 = vpop.trf.xlu0
        %v1066 = vpop.trf.xlu0
        %v1067 = vpop.trf.xlu0
        %v1068 = vpop.trf.xlu0
        %v1069 = vpop.trf.xlu0
        %v1070 = vpop.trf.xlu0
        %v1071 = vpop.trf.xlu0
        %v1072 = vpop.trf.xlu0
        %v1073 = vpop.trf.xlu0
        %v1074 = vpop.trf.xlu0
        %v1075 = vpop.trf.xlu0
        %v1076 = vpop.trf.xlu0
        %v1078 = vsel %vm722, %v1061, 0
        %v1081 = vsel %vm722, %v1062, 0
        %v1084 = vsel %vm722, %v1063, 0
        %v1087 = vsel %vm722, %v1064, 0
        %v1090 = vsel %vm722, %v1065, 0
        %v1093 = vsel %vm722, %v1066, 0
        %v1096 = vsel %vm722, %v1067, 0
        %v1099 = vsel %vm722, %v1068, 0
        %1101 = vmatprep.subr.mxu0 0.0
        %1102 = vmatpush1.msra.mxu0 %v657
        %1103 = vmatprep.subr.mxu0 0.0
        %1104 = vmatpush1.msra.mxu0 0.0
        %1105 = vmatprep.subr.mxu0 0.0
        %1106 = vmatpush1.msra.mxu0 0.0
        %1107 = vmatprep.subr.mxu0 0.0
        %1108 = vmatpush1.msra.mxu0 0.0
        %1109 = vmatprep.subr.mxu0 0.0
        %1110 = vmatpush1.msra.mxu0 0.0
        %1111 = vmatprep.subr.mxu0 0.0
        %1112 = vmatpush1.msra.mxu0 0.0
        %1113 = vmatprep.subr.mxu0 0.0
        %1114 = vmatpush1.msra.mxu0 0.0
        %1115 = vmatprep.subr.mxu0 0.0
        %1116 = vmatpush1.msra.mxu0 0.0
        %1117 = vmatprep.subr.mxu0 0.0
        %1118 = vmatpush1.msra.mxu0 0.0
        %1119 = vmatprep.subr.mxu0 0.0
        %1120 = vmatpush1.msra.mxu0 0.0
        %1121 = vmatprep.subr.mxu0 0.0
        %1122 = vmatpush1.msra.mxu0 0.0
        %1123 = vmatprep.subr.mxu0 0.0
        %1124 = vmatpush1.msra.mxu0 0.0
        %1125 = vmatprep.subr.mxu0 0.0
        %1126 = vmatpush1.msra.mxu0 0.0
        %1127 = vmatprep.subr.mxu0 0.0
        %1128 = vmatpush1.msra.mxu0 0.0
        %1129 = vmatprep.subr.mxu0 0.0
        %1130 = vmatpush1.msra.mxu0 0.0
        %1131 = vmatprep.subr.mxu0 0.0
        %1132 = vmatpush1.msra.mxu0 0.0
        %1133 = vmatprep.subr.mxu0 0.0
        %1134 = vmatpush1.msra.mxu0 0.0
        %1135 = vmatprep.subr.mxu0 0.0
        %1136 = vmatpush1.msra.mxu0 0.0
        %1137 = vmatprep.subr.mxu0 0.0
        %1138 = vmatpush1.msra.mxu0 0.0
        %1139 = vmatprep.subr.mxu0 0.0
        %1140 = vmatpush1.msra.mxu0 0.0
        %1141 = vmatprep.subr.mxu0 0.0
        %1142 = vmatpush1.msra.mxu0 0.0
        %1143 = vmatprep.subr.mxu0 0.0
        %1144 = vmatpush1.msra.mxu0 0.0
        %1145 = vmatprep.subr.mxu0 0.0
        %1146 = vmatpush1.msra.mxu0 0.0
        %1147 = vmatprep.subr.mxu0 0.0
        %1148 = vmatpush1.msra.mxu0 0.0
        %1149 = vmatprep.subr.mxu0 0.0
        %1150 = vmatpush1.msra.mxu0 0.0
        %1151 = vmatprep.subr.mxu0 0.0
        %1152 = vmatpush1.msra.mxu0 0.0
        %1153 = vmatprep.subr.mxu0 0.0
        %1154 = vmatpush1.msra.mxu0 0.0
        %1155 = vmatprep.subr.mxu0 0.0
        %1156 = vmatpush1.msra.mxu0 0.0
        %1157 = vmatprep.subr.mxu0 0.0
        %1158 = vmatpush1.msra.mxu0 0.0
        %1159 = vmatprep.subr.mxu0 0.0
        %1160 = vmatpush1.msra.mxu0 0.0
        %1161 = vmatprep.subr.mxu0 0.0
        %1162 = vmatpush1.msra.mxu0 0.0
        %1163 = vmatprep.subr.mxu0 0.0
        %1164 = vmatpush1.msra.mxu0 0.0
        %1165 = vmatprep.mubr.f32.mxu0 0.0
        %1166 = vmatmul.mubr.f32.gmra.mrb[0].mxu0 %v1078
        %v1167 = vpop.f32.mrb[0].mxu0
        %v1168 = vadd.f32 0.0, %v1167
        %v1169 = vpop.f32.mrb[0].mxu0
        %1170 = vmatprep.mubr.f32.mxu0 0.0
        %1171 = vmatmul.mubr.f32.gmra.mrb[0].mxu0 %v1081
        %v1172 = vpop.f32.mrb[0].mxu0
        %v1173 = vadd.f32 0.0, %v1172
        %v1174 = vpop.f32.mrb[0].mxu0
        %1175 = vmatprep.mubr.f32.mxu0 0.0
        %1176 = vmatmul.mubr.f32.gmra.mrb[0].mxu0 %v1084
        %v1177 = vpop.f32.mrb[0].mxu0
        %v1178 = vadd.f32 0.0, %v1177
        %v1179 = vpop.f32.mrb[0].mxu0
        %1180 = vmatprep.mubr.f32.mxu0 0.0
        %1181 = vmatmul.mubr.f32.gmra.mrb[0].mxu0 %v1087
        %v1182 = vpop.f32.mrb[0].mxu0
        %v1183 = vadd.f32 0.0, %v1182
        %v1184 = vpop.f32.mrb[0].mxu0
        %1185 = vmatprep.mubr.f32.mxu0 0.0
        %1186 = vmatmul.mubr.f32.gmra.mrb[0].mxu0 %v1090
        %v1187 = vpop.f32.mrb[0].mxu0
        %v1188 = vadd.f32 0.0, %v1187
        %v1189 = vpop.f32.mrb[0].mxu0
        %1190 = vmatprep.mubr.f32.mxu0 0.0
        %1191 = vmatmul.mubr.f32.gmra.mrb[0].mxu0 %v1093
        %v1192 = vpop.f32.mrb[0].mxu0
        %v1193 = vadd.f32 0.0, %v1192
        %v1194 = vpop.f32.mrb[0].mxu0
        %1195 = vmatprep.mubr.f32.mxu0 0.0
        %1196 = vmatmul.mubr.f32.gmra.mrb[0].mxu0 %v1096
        %v1197 = vpop.f32.mrb[0].mxu0
        %v1198 = vadd.f32 0.0, %v1197
        %v1199 = vpop.f32.mrb[0].mxu0
        %1200 = vmatprep.mubr.f32.mxu0 0.0
        %1201 = vmatmul.mubr.f32.gmra.mrb[0].mxu0 %v1099
        %v1202 = vpop.f32.mrb[0].mxu0
        %v1203 = vadd.f32 0.0, %v1202
        %v1204 = vpop.f32.mrb[0].mxu0
        %1205 = vdwg.mxu0
        %v1206 = vmul.f32 %v1168, 0.35355338
        %v1207 = vmul.f32 %v1173, 0.35355338
        %v1208 = vmul.f32 %v1178, 0.35355338
        %v1209 = vmul.f32 %v1183, 0.35355338
        %v1210 = vmul.f32 %v1188, 0.35355338
        %v1211 = vmul.f32 %v1193, 0.35355338
        %v1212 = vmul.f32 %v1198, 0.35355338
        %v1213 = vmul.f32 %v1203, 0.35355338
        %v1214 = vsel %vm424, %v1206, -inf
        %1215 = vmax.xlane.f32.xlu0 %v1214
        %v1216 = vpop.xlane.xlu0 %1215
        %v1217 = vsel %vm424, %v1207, -inf
        %1218 = vmax.xlane.f32.xlu0 %v1217
        %v1219 = vpop.xlane.xlu0 %1218
        %v1220 = vsel %vm424, %v1208, -inf
        %1221 = vmax.xlane.f32.xlu0 %v1220
        %v1222 = vpop.xlane.xlu0 %1221
        %v1223 = vsel %vm424, %v1209, -inf
        %1224 = vmax.xlane.f32.xlu0 %v1223
        %v1225 = vpop.xlane.xlu0 %1224
        %v1226 = vsel %vm424, %v1210, -inf
        %1227 = vmax.xlane.f32.xlu0 %v1226
        %v1228 = vpop.xlane.xlu0 %1227
        %v1229 = vsel %vm424, %v1211, -inf
        %1230 = vmax.xlane.f32.xlu0 %v1229
        %v1231 = vpop.xlane.xlu0 %1230
        %v1232 = vsel %vm424, %v1212, -inf
        %1233 = vmax.xlane.f32.xlu0 %v1232
        %v1234 = vpop.xlane.xlu0 %1233
        %v1235 = vsel %vm424, %v1213, -inf
        %1236 = vmax.xlane.f32.xlu0 %v1235
        %v1237 = vpop.xlane.xlu0 %1236
        %v1238 = vsub.f32 %v1206, %v1216
        %v1239 = vsub.f32 %v1207, %v1219
        %v1240 = vsub.f32 %v1208, %v1222
        %v1241 = vsub.f32 %v1209, %v1225
        %v1242 = vsub.f32 %v1210, %v1228
        %v1243 = vsub.f32 %v1211, %v1231
        %v1244 = vsub.f32 %v1212, %v1234
        %v1245 = vsub.f32 %v1213, %v1237
        %v1246 = vmul.f32 %v1238, 1.442695
        %v1247 = vpow.pop %v1246
        %v1248 = vmul.f32 %v1239, 1.442695
        %v1249 = vpow.pop %v1248
        %v1250 = vmul.f32 %v1240, 1.442695
        %v1251 = vpow.pop %v1250
        %v1252 = vmul.f32 %v1241, 1.442695
        %v1253 = vpow.pop %v1252
        %v1254 = vmul.f32 %v1242, 1.442695
        %v1255 = vpow.pop %v1254
        %v1256 = vmul.f32 %v1243, 1.442695
        %v1257 = vpow.pop %v1256
        %v1258 = vmul.f32 %v1244, 1.442695
        %v1259 = vpow.pop %v1258
        %v1260 = vmul.f32 %v1245, 1.442695
        %v1261 = vpow.pop %v1260
        %v1262 = vsel %vm424, %v1247, 0.0
        %1263 = vadd.xlane.f32.xlu0 %v1262
        %v1264 = vpop.xlane.xlu0 %1263
        %v1265 = vsel %vm424, %v1249, 0.0
        %1266 = vadd.xlane.f32.xlu0 %v1265
        %v1267 = vpop.xlane.xlu0 %1266
        %v1268 = vsel %vm424, %v1251, 0.0
        %1269 = vadd.xlane.f32.xlu0 %v1268
        %v1270 = vpop.xlane.xlu0 %1269
        %v1271 = vsel %vm424, %v1253, 0.0
        %1272 = vadd.xlane.f32.xlu0 %v1271
        %v1273 = vpop.xlane.xlu0 %1272
        %v1274 = vsel %vm424, %v1255, 0.0
        %1275 = vadd.xlane.f32.xlu0 %v1274
        %v1276 = vpop.xlane.xlu0 %1275
        %v1277 = vsel %vm424, %v1257, 0.0
        %1278 = vadd.xlane.f32.xlu0 %v1277
        %v1279 = vpop.xlane.xlu0 %1278
        %v1280 = vsel %vm424, %v1259, 0.0
        %1281 = vadd.xlane.f32.xlu0 %v1280
        %v1282 = vpop.xlane.xlu0 %1281
        %v1283 = vsel %vm424, %v1261, 0.0
        %1284 = vadd.xlane.f32.xlu0 %v1283
        %v1285 = vpop.xlane.xlu0 %1284
        %v1286 = vrcp.pop %v1264
        %v1287 = vmul.f32 %v1247, %v1286
        %v1288 = vrcp.pop %v1267
        %v1289 = vmul.f32 %v1249, %v1288
        %v1290 = vrcp.pop %v1270
        %v1291 = vmul.f32 %v1251, %v1290
        %v1292 = vrcp.pop %v1273
        %v1293 = vmul.f32 %v1253, %v1292
        %v1294 = vrcp.pop %v1276
        %v1295 = vmul.f32 %v1255, %v1294
        %v1296 = vrcp.pop %v1279
        %v1297 = vmul.f32 %v1257, %v1296
        %v1298 = vrcp.pop %v1282
        %v1299 = vmul.f32 %v1259, %v1298
        %v1300 = vrcp.pop %v1285
        %v1301 = vmul.f32 %v1261, %v1300
        %v1303 = vsel %vm424, %v677, 0
        %v1306 = vsel %vm424, %v1287, 0
        %v1309 = vsel %vm424, %v1289, 0
        %v1312 = vsel %vm424, %v1291, 0
        %v1315 = vsel %vm424, %v1293, 0
        %v1318 = vsel %vm424, %v1295, 0
        %v1321 = vsel %vm424, %v1297, 0
        %v1324 = vsel %vm424, %v1299, 0
        %v1327 = vsel %vm424, %v1301, 0
        %1329 = vmatprep.subr.mxu0 0.0
        %1330 = vmatpush1.xpose.msra.mxu0 %v1306
        %1331 = vmatprep.subr.mxu0 0.0
        %1332 = vmatpush1.xpose.msra.mxu0 %v1309
        %1333 = vmatprep.subr.mxu0 0.0
        %1334 = vmatpush1.xpose.msra.mxu0 %v1312
        %1335 = vmatprep.subr.mxu0 0.0
        %1336 = vmatpush1.xpose.msra.mxu0 %v1315
        %1337 = vmatprep.subr.mxu0 0.0
        %1338 = vmatpush1.xpose.msra.mxu0 %v1318
        %1339 = vmatprep.subr.mxu0 0.0
        %1340 = vmatpush1.xpose.msra.mxu0 %v1321
        %1341 = vmatprep.subr.mxu0 0.0
        %1342 = vmatpush1.xpose.msra.mxu0 %v1324
        %1343 = vmatprep.subr.mxu0 0.0
        %1344 = vmatpush1.xpose.msra.mxu0 %v1327
        %1345 = vmatprep.subr.mxu0 0.0
        %1346 = vmatpush1.xpose.msra.mxu0 0.0
        %1347 = vmatprep.subr.mxu0 0.0
        %1348 = vmatpush1.xpose.msra.mxu0 0.0
        %1349 = vmatprep.subr.mxu0 0.0
        %1350 = vmatpush1.xpose.msra.mxu0 0.0
        %1351 = vmatprep.subr.mxu0 0.0
        %1352 = vmatpush1.xpose.msra.mxu0 0.0
        %1353 = vmatprep.subr.mxu0 0.0
        %1354 = vmatpush1.xpose.msra.mxu0 0.0
        %1355 = vmatprep.subr.mxu0 0.0
        %1356 = vmatpush1.xpose.msra.mxu0 0.0
        %1357 = vmatprep.subr.mxu0 0.0
        %1358 = vmatpush1.xpose.msra.mxu0 0.0
        %1359 = vmatprep.subr.mxu0 0.0
        %1360 = vmatpush1.xpose.msra.mxu0 0.0
        %1361 = vmatprep.subr.mxu0 0.0
        %1362 = vmatpush1.xpose.msra.mxu0 0.0
        %1363 = vmatprep.subr.mxu0 0.0
        %1364 = vmatpush1.xpose.msra.mxu0 0.0
        %1365 = vmatprep.subr.mxu0 0.0
        %1366 = vmatpush1.xpose.msra.mxu0 0.0
        %1367 = vmatprep.subr.mxu0 0.0
        %1368 = vmatpush1.xpose.msra.mxu0 0.0
        %1369 = vmatprep.subr.mxu0 0.0
        %1370 = vmatpush1.xpose.msra.mxu0 0.0
        %1371 = vmatprep.subr.mxu0 0.0
        %1372 = vmatpush1.xpose.msra.mxu0 0.0
        %1373 = vmatprep.subr.mxu0 0.0
        %1374 = vmatpush1.xpose.msra.mxu0 0.0
        %1375 = vmatprep.subr.mxu0 0.0
        %1376 = vmatpush1.xpose.msra.mxu0 0.0
        %1377 = vmatprep.subr.mxu0 0.0
        %1378 = vmatpush1.xpose.msra.mxu0 0.0
        %1379 = vmatprep.subr.mxu0 0.0
        %1380 = vmatpush1.xpose.msra.mxu0 0.0
        %1381 = vmatprep.subr.mxu0 0.0
        %1382 = vmatpush1.xpose.msra.mxu0 0.0
        %1383 = vmatprep.subr.mxu0 0.0
        %1384 = vmatpush1.xpose.msra.mxu0 0.0
        %1385 = vmatprep.subr.mxu0 0.0
        %1386 = vmatpush1.xpose.msra.mxu0 0.0
        %1387 = vmatprep.subr.mxu0 0.0
        %1388 = vmatpush1.xpose.msra.mxu0 0.0
        %1389 = vmatprep.subr.mxu0 0.0
        %1390 = vmatpush1.xpose.msra.mxu0 0.0
        %1391 = vmatprep.subr.mxu0 0.0
        %1392 = vmatpush1.xpose.msra.mxu0 0.0
        %1393 = vmatprep.mubr.f32.mxu0 0.0
        %1394 = vmatmul.mubr.f32.gmra.mrb[0].mxu0 %v1303
        %v1395 = vpop.f32.mrb[0].mxu0
        %v1396 = vadd.f32 0.0, %v1395
        %v1397 = vpop.f32.mrb[0].mxu0
        %1398 = vdwg.mxu0
        %1399 = vxpose.xlu0.b32.start [1/16] %v642, 128
        %1400 = vxpose.xlu0.b32.cont [2/16] 0.0, 128
        %1401 = vxpose.xlu0.b32.cont [3/16] 0.0, 128
        %1402 = vxpose.xlu0.b32.cont [4/16] 0.0, 128
        %1403 = vxpose.xlu0.b32.cont [5/16] 0.0, 128
        %1404 = vxpose.xlu0.b32.cont [6/16] 0.0, 128
        %1405 = vxpose.xlu0.b32.cont [7/16] 0.0, 128
        %1406 = vxpose.xlu0.b32.cont [8/16] 0.0, 128
        %1407 = vxpose.xlu0.b32.cont [9/16] 0.0, 128
        %1408 = vxpose.xlu0.b32.cont [10/16] 0.0, 128
        %1409 = vxpose.xlu0.b32.cont [11/16] 0.0, 128
        %1410 = vxpose.xlu0.b32.cont [12/16] 0.0, 128
        %1411 = vxpose.xlu0.b32.cont [13/16] 0.0, 128
        %1412 = vxpose.xlu0.b32.cont [14/16] 0.0, 128
        %1413 = vxpose.xlu0.b32.cont [15/16] 0.0, 128
        %1414 = vxpose.xlu0.b32.end [16/16] 0.0, 128
        %v1415 = vpop.trf.xlu0
        %v1416 = vpop.trf.xlu0
        %v1417 = vpop.trf.xlu0
        %v1418 = vpop.trf.xlu0
        %v1419 = vpop.trf.xlu0
        %v1420 = vpop.trf.xlu0
        %v1421 = vpop.trf.xlu0
        %v1422 = vpop.trf.xlu0
        %v1423 = vpop.trf.xlu0
        %v1424 = vpop.trf.xlu0
        %v1425 = vpop.trf.xlu0
        %v1426 = vpop.trf.xlu0
        %v1427 = vpop.trf.xlu0
        %v1428 = vpop.trf.xlu0
        %v1429 = vpop.trf.xlu0
        %v1430 = vpop.trf.xlu0
        %v1432 = vsel %vm722, %v1415, 0
        %v1435 = vsel %vm722, %v1416, 0
        %v1438 = vsel %vm722, %v1417, 0
        %v1441 = vsel %vm722, %v1418, 0
        %v1444 = vsel %vm722, %v1419, 0
        %v1447 = vsel %vm722, %v1420, 0
        %v1450 = vsel %vm722, %v1421, 0
        %v1453 = vsel %vm722, %v1422, 0
        %1455 = vmatprep.subr.mxu0 0.0
        %1456 = vmatpush1.msra.mxu0 %v662
        %1457 = vmatprep.subr.mxu0 0.0
        %1458 = vmatpush1.msra.mxu0 0.0
        %1459 = vmatprep.subr.mxu0 0.0
        %1460 = vmatpush1.msra.mxu0 0.0
        %1461 = vmatprep.subr.mxu0 0.0
        %1462 = vmatpush1.msra.mxu0 0.0
        %1463 = vmatprep.subr.mxu0 0.0
        %1464 = vmatpush1.msra.mxu0 0.0
        %1465 = vmatprep.subr.mxu0 0.0
        %1466 = vmatpush1.msra.mxu0 0.0
        %1467 = vmatprep.subr.mxu0 0.0
        %1468 = vmatpush1.msra.mxu0 0.0
        %1469 = vmatprep.subr.mxu0 0.0
        %1470 = vmatpush1.msra.mxu0 0.0
        %1471 = vmatprep.subr.mxu0 0.0
        %1472 = vmatpush1.msra.mxu0 0.0
        %1473 = vmatprep.subr.mxu0 0.0
        %1474 = vmatpush1.msra.mxu0 0.0
        %1475 = vmatprep.subr.mxu0 0.0
        %1476 = vmatpush1.msra.mxu0 0.0
        %1477 = vmatprep.subr.mxu0 0.0
        %1478 = vmatpush1.msra.mxu0 0.0
        %1479 = vmatprep.subr.mxu0 0.0
        %1480 = vmatpush1.msra.mxu0 0.0
        %1481 = vmatprep.subr.mxu0 0.0
        %1482 = vmatpush1.msra.mxu0 0.0
        %1483 = vmatprep.subr.mxu0 0.0
        %1484 = vmatpush1.msra.mxu0 0.0
        %1485 = vmatprep.subr.mxu0 0.0
        %1486 = vmatpush1.msra.mxu0 0.0
        %1487 = vmatprep.subr.mxu0 0.0
        %1488 = vmatpush1.msra.mxu0 0.0
        %1489 = vmatprep.subr.mxu0 0.0
        %1490 = vmatpush1.msra.mxu0 0.0
        %1491 = vmatprep.subr.mxu0 0.0
        %1492 = vmatpush1.msra.mxu0 0.0
        %1493 = vmatprep.subr.mxu0 0.0
        %1494 = vmatpush1.msra.mxu0 0.0
        %1495 = vmatprep.subr.mxu0 0.0
        %1496 = vmatpush1.msra.mxu0 0.0
        %1497 = vmatprep.subr.mxu0 0.0
        %1498 = vmatpush1.msra.mxu0 0.0
        %1499 = vmatprep.subr.mxu0 0.0
        %1500 = vmatpush1.msra.mxu0 0.0
        %1501 = vmatprep.subr.mxu0 0.0
        %1502 = vmatpush1.msra.mxu0 0.0
        %1503 = vmatprep.subr.mxu0 0.0
        %1504 = vmatpush1.msra.mxu0 0.0
        %1505 = vmatprep.subr.mxu0 0.0
        %1506 = vmatpush1.msra.mxu0 0.0
        %1507 = vmatprep.subr.mxu0 0.0
        %1508 = vmatpush1.msra.mxu0 0.0
        %1509 = vmatprep.subr.mxu0 0.0
        %1510 = vmatpush1.msra.mxu0 0.0
        %1511 = vmatprep.subr.mxu0 0.0
        %1512 = vmatpush1.msra.mxu0 0.0
        %1513 = vmatprep.subr.mxu0 0.0
        %1514 = vmatpush1.msra.mxu0 0.0
        %1515 = vmatprep.subr.mxu0 0.0
        %1516 = vmatpush1.msra.mxu0 0.0
        %1517 = vmatprep.subr.mxu0 0.0
        %1518 = vmatpush1.msra.mxu0 0.0
        %1519 = vmatprep.mubr.f32.mxu0 0.0
        %1520 = vmatmul.mubr.f32.gmra.mrb[0].mxu0 %v1432
        %v1521 = vpop.f32.mrb[0].mxu0
        %v1522 = vadd.f32 0.0, %v1521
        %v1523 = vpop.f32.mrb[0].mxu0
        %1524 = vmatprep.mubr.f32.mxu0 0.0
        %1525 = vmatmul.mubr.f32.gmra.mrb[0].mxu0 %v1435
        %v1526 = vpop.f32.mrb[0].mxu0
        %v1527 = vadd.f32 0.0, %v1526
        %v1528 = vpop.f32.mrb[0].mxu0
        %1529 = vmatprep.mubr.f32.mxu0 0.0
        %1530 = vmatmul.mubr.f32.gmra.mrb[0].mxu0 %v1438
        %v1531 = vpop.f32.mrb[0].mxu0
        %v1532 = vadd.f32 0.0, %v1531
        %v1533 = vpop.f32.mrb[0].mxu0
        %1534 = vmatprep.mubr.f32.mxu0 0.0
        %1535 = vmatmul.mubr.f32.gmra.mrb[0].mxu0 %v1441
        %v1536 = vpop.f32.mrb[0].mxu0
        %v1537 = vadd.f32 0.0, %v1536
        %v1538 = vpop.f32.mrb[0].mxu0
        %1539 = vmatprep.mubr.f32.mxu0 0.0
        %1540 = vmatmul.mubr.f32.gmra.mrb[0].mxu0 %v1444
        %v1541 = vpop.f32.mrb[0].mxu0
        %v1542 = vadd.f32 0.0, %v1541
        %v1543 = vpop.f32.mrb[0].mxu0
        %1544 = vmatprep.mubr.f32.mxu0 0.0
        %1545 = vmatmul.mubr.f32.gmra.mrb[0].mxu0 %v1447
        %v1546 = vpop.f32.mrb[0].mxu0
        %v1547 = vadd.f32 0.0, %v1546
        %v1548 = vpop.f32.mrb[0].mxu0
        %1549 = vmatprep.mubr.f32.mxu0 0.0
        %1550 = vmatmul.mubr.f32.gmra.mrb[0].mxu0 %v1450
        %v1551 = vpop.f32.mrb[0].mxu0
        %v1552 = vadd.f32 0.0, %v1551
        %v1553 = vpop.f32.mrb[0].mxu0
        %1554 = vmatprep.mubr.f32.mxu0 0.0
        %1555 = vmatmul.mubr.f32.gmra.mrb[0].mxu0 %v1453
        %v1556 = vpop.f32.mrb[0].mxu0
        %v1557 = vadd.f32 0.0, %v1556
        %v1558 = vpop.f32.mrb[0].mxu0
        %1559 = vdwg.mxu0
        %v1560 = vmul.f32 %v1522, 0.35355338
        %v1561 = vmul.f32 %v1527, 0.35355338
        %v1562 = vmul.f32 %v1532, 0.35355338
        %v1563 = vmul.f32 %v1537, 0.35355338
        %v1564 = vmul.f32 %v1542, 0.35355338
        %v1565 = vmul.f32 %v1547, 0.35355338
        %v1566 = vmul.f32 %v1552, 0.35355338
        %v1567 = vmul.f32 %v1557, 0.35355338
        %v1568 = vsel %vm424, %v1560, -inf
        %1569 = vmax.xlane.f32.xlu0 %v1568
        %v1570 = vpop.xlane.xlu0 %1569
        %v1571 = vsel %vm424, %v1561, -inf
        %1572 = vmax.xlane.f32.xlu0 %v1571
        %v1573 = vpop.xlane.xlu0 %1572
        %v1574 = vsel %vm424, %v1562, -inf
        %1575 = vmax.xlane.f32.xlu0 %v1574
        %v1576 = vpop.xlane.xlu0 %1575
        %v1577 = vsel %vm424, %v1563, -inf
        %1578 = vmax.xlane.f32.xlu0 %v1577
        %v1579 = vpop.xlane.xlu0 %1578
        %v1580 = vsel %vm424, %v1564, -inf
        %1581 = vmax.xlane.f32.xlu0 %v1580
        %v1582 = vpop.xlane.xlu0 %1581
        %v1583 = vsel %vm424, %v1565, -inf
        %1584 = vmax.xlane.f32.xlu0 %v1583
        %v1585 = vpop.xlane.xlu0 %1584
        %v1586 = vsel %vm424, %v1566, -inf
        %1587 = vmax.xlane.f32.xlu0 %v1586
        %v1588 = vpop.xlane.xlu0 %1587
        %v1589 = vsel %vm424, %v1567, -inf
        %1590 = vmax.xlane.f32.xlu0 %v1589
        %v1591 = vpop.xlane.xlu0 %1590
        %v1592 = vsub.f32 %v1560, %v1570
        %v1593 = vsub.f32 %v1561, %v1573
        %v1594 = vsub.f32 %v1562, %v1576
        %v1595 = vsub.f32 %v1563, %v1579
        %v1596 = vsub.f32 %v1564, %v1582
        %v1597 = vsub.f32 %v1565, %v1585
        %v1598 = vsub.f32 %v1566, %v1588
        %v1599 = vsub.f32 %v1567, %v1591
        %v1600 = vmul.f32 %v1592, 1.442695
        %v1601 = vpow.pop %v1600
        %v1602 = vmul.f32 %v1593, 1.442695
        %v1603 = vpow.pop %v1602
        %v1604 = vmul.f32 %v1594, 1.442695
        %v1605 = vpow.pop %v1604
        %v1606 = vmul.f32 %v1595, 1.442695
        %v1607 = vpow.pop %v1606
        %v1608 = vmul.f32 %v1596, 1.442695
        %v1609 = vpow.pop %v1608
        %v1610 = vmul.f32 %v1597, 1.442695
        %v1611 = vpow.pop %v1610
        %v1612 = vmul.f32 %v1598, 1.442695
        %v1613 = vpow.pop %v1612
        %v1614 = vmul.f32 %v1599, 1.442695
        %v1615 = vpow.pop %v1614
        %v1616 = vsel %vm424, %v1601, 0.0
        %1617 = vadd.xlane.f32.xlu0 %v1616
        %v1618 = vpop.xlane.xlu0 %1617
        %v1619 = vsel %vm424, %v1603, 0.0
        %1620 = vadd.xlane.f32.xlu0 %v1619
        %v1621 = vpop.xlane.xlu0 %1620
        %v1622 = vsel %vm424, %v1605, 0.0
        %1623 = vadd.xlane.f32.xlu0 %v1622
        %v1624 = vpop.xlane.xlu0 %1623
        %v1625 = vsel %vm424, %v1607, 0.0
        %1626 = vadd.xlane.f32.xlu0 %v1625
        %v1627 = vpop.xlane.xlu0 %1626
        %v1628 = vsel %vm424, %v1609, 0.0
        %1629 = vadd.xlane.f32.xlu0 %v1628
        %v1630 = vpop.xlane.xlu0 %1629
        %v1631 = vsel %vm424, %v1611, 0.0
        %1632 = vadd.xlane.f32.xlu0 %v1631
        %v1633 = vpop.xlane.xlu0 %1632
        %v1634 = vsel %vm424, %v1613, 0.0
        %1635 = vadd.xlane.f32.xlu0 %v1634
        %v1636 = vpop.xlane.xlu0 %1635
        %v1637 = vsel %vm424, %v1615, 0.0
        %1638 = vadd.xlane.f32.xlu0 %v1637
        %v1639 = vpop.xlane.xlu0 %1638
        %v1640 = vrcp.pop %v1618
        %v1641 = vmul.f32 %v1601, %v1640
        %v1642 = vrcp.pop %v1621
        %v1643 = vmul.f32 %v1603, %v1642
        %v1644 = vrcp.pop %v1624
        %v1645 = vmul.f32 %v1605, %v1644
        %v1646 = vrcp.pop %v1627
        %v1647 = vmul.f32 %v1607, %v1646
        %v1648 = vrcp.pop %v1630
        %v1649 = vmul.f32 %v1609, %v1648
        %v1650 = vrcp.pop %v1633
        %v1651 = vmul.f32 %v1611, %v1650
        %v1652 = vrcp.pop %v1636
        %v1653 = vmul.f32 %v1613, %v1652
        %v1654 = vrcp.pop %v1639
        %v1655 = vmul.f32 %v1615, %v1654
        %v1657 = vsel %vm424, %v682, 0
        %v1660 = vsel %vm424, %v1641, 0
        %v1663 = vsel %vm424, %v1643, 0
        %v1666 = vsel %vm424, %v1645, 0
        %v1669 = vsel %vm424, %v1647, 0
        %v1672 = vsel %vm424, %v1649, 0
        %v1675 = vsel %vm424, %v1651, 0
        %v1678 = vsel %vm424, %v1653, 0
        %v1681 = vsel %vm424, %v1655, 0
        %1683 = vmatprep.subr.mxu0 0.0
        %1684 = vmatpush1.xpose.msra.mxu0 %v1660
        %1685 = vmatprep.subr.mxu0 0.0
        %1686 = vmatpush1.xpose.msra.mxu0 %v1663
        %1687 = vmatprep.subr.mxu0 0.0
        %1688 = vmatpush1.xpose.msra.mxu0 %v1666
        %1689 = vmatprep.subr.mxu0 0.0
        %1690 = vmatpush1.xpose.msra.mxu0 %v1669
        %1691 = vmatprep.subr.mxu0 0.0
        %1692 = vmatpush1.xpose.msra.mxu0 %v1672
        %1693 = vmatprep.subr.mxu0 0.0
        %1694 = vmatpush1.xpose.msra.mxu0 %v1675
        %1695 = vmatprep.subr.mxu0 0.0
        %1696 = vmatpush1.xpose.msra.mxu0 %v1678
        %1697 = vmatprep.subr.mxu0 0.0
        %1698 = vmatpush1.xpose.msra.mxu0 %v1681
        %1699 = vmatprep.subr.mxu0 0.0
        %1700 = vmatpush1.xpose.msra.mxu0 0.0
        %1701 = vmatprep.subr.mxu0 0.0
        %1702 = vmatpush1.xpose.msra.mxu0 0.0
        %1703 = vmatprep.subr.mxu0 0.0
        %1704 = vmatpush1.xpose.msra.mxu0 0.0
        %1705 = vmatprep.subr.mxu0 0.0
        %1706 = vmatpush1.xpose.msra.mxu0 0.0
        %1707 = vmatprep.subr.mxu0 0.0
        %1708 = vmatpush1.xpose.msra.mxu0 0.0
        %1709 = vmatprep.subr.mxu0 0.0
        %1710 = vmatpush1.xpose.msra.mxu0 0.0
        %1711 = vmatprep.subr.mxu0 0.0
        %1712 = vmatpush1.xpose.msra.mxu0 0.0
        %1713 = vmatprep.subr.mxu0 0.0
        %1714 = vmatpush1.xpose.msra.mxu0 0.0
        %1715 = vmatprep.subr.mxu0 0.0
        %1716 = vmatpush1.xpose.msra.mxu0 0.0
        %1717 = vmatprep.subr.mxu0 0.0
        %1718 = vmatpush1.xpose.msra.mxu0 0.0
        %1719 = vmatprep.subr.mxu0 0.0
        %1720 = vmatpush1.xpose.msra.mxu0 0.0
        %1721 = vmatprep.subr.mxu0 0.0
        %1722 = vmatpush1.xpose.msra.mxu0 0.0
        %1723 = vmatprep.subr.mxu0 0.0
        %1724 = vmatpush1.xpose.msra.mxu0 0.0
        %1725 = vmatprep.subr.mxu0 0.0
        %1726 = vmatpush1.xpose.msra.mxu0 0.0
        %1727 = vmatprep.subr.mxu0 0.0
        %1728 = vmatpush1.xpose.msra.mxu0 0.0
        %1729 = vmatprep.subr.mxu0 0.0
        %1730 = vmatpush1.xpose.msra.mxu0 0.0
        %1731 = vmatprep.subr.mxu0 0.0
        %1732 = vmatpush1.xpose.msra.mxu0 0.0
        %1733 = vmatprep.subr.mxu0 0.0
        %1734 = vmatpush1.xpose.msra.mxu0 0.0
        %1735 = vmatprep.subr.mxu0 0.0
        %1736 = vmatpush1.xpose.msra.mxu0 0.0
        %1737 = vmatprep.subr.mxu0 0.0
        %1738 = vmatpush1.xpose.msra.mxu0 0.0
        %1739 = vmatprep.subr.mxu0 0.0
        %1740 = vmatpush1.xpose.msra.mxu0 0.0
        %1741 = vmatprep.subr.mxu0 0.0
        %1742 = vmatpush1.xpose.msra.mxu0 0.0
        %1743 = vmatprep.subr.mxu0 0.0
        %1744 = vmatpush1.xpose.msra.mxu0 0.0
        %1745 = vmatprep.subr.mxu0 0.0
        %1746 = vmatpush1.xpose.msra.mxu0 0.0
        %1747 = vmatprep.mubr.f32.mxu0 0.0
        %1748 = vmatmul.mubr.f32.gmra.mrb[0].mxu0 %v1657
        %v1749 = vpop.f32.mrb[0].mxu0
        %v1750 = vadd.f32 0.0, %v1749
        %v1751 = vpop.f32.mrb[0].mxu0
        %1752 = vdwg.mxu0
        %1753 = vxpose.xlu0.b32.start [1/16] %v647, 128
        %1754 = vxpose.xlu0.b32.cont [2/16] 0.0, 128
        %1755 = vxpose.xlu0.b32.cont [3/16] 0.0, 128
        %1756 = vxpose.xlu0.b32.cont [4/16] 0.0, 128
        %1757 = vxpose.xlu0.b32.cont [5/16] 0.0, 128
        %1758 = vxpose.xlu0.b32.cont [6/16] 0.0, 128
        %1759 = vxpose.xlu0.b32.cont [7/16] 0.0, 128
        %1760 = vxpose.xlu0.b32.cont [8/16] 0.0, 128
        %1761 = vxpose.xlu0.b32.cont [9/16] 0.0, 128
        %1762 = vxpose.xlu0.b32.cont [10/16] 0.0, 128
        %1763 = vxpose.xlu0.b32.cont [11/16] 0.0, 128
        %1764 = vxpose.xlu0.b32.cont [12/16] 0.0, 128
        %1765 = vxpose.xlu0.b32.cont [13/16] 0.0, 128
        %1766 = vxpose.xlu0.b32.cont [14/16] 0.0, 128
        %1767 = vxpose.xlu0.b32.cont [15/16] 0.0, 128
        %1768 = vxpose.xlu0.b32.end [16/16] 0.0, 128
        %v1769 = vpop.trf.xlu0
        %v1770 = vpop.trf.xlu0
        %v1771 = vpop.trf.xlu0
        %v1772 = vpop.trf.xlu0
        %v1773 = vpop.trf.xlu0
        %v1774 = vpop.trf.xlu0
        %v1775 = vpop.trf.xlu0
        %v1776 = vpop.trf.xlu0
        %v1777 = vpop.trf.xlu0
        %v1778 = vpop.trf.xlu0
        %v1779 = vpop.trf.xlu0
        %v1780 = vpop.trf.xlu0
        %v1781 = vpop.trf.xlu0
        %v1782 = vpop.trf.xlu0
        %v1783 = vpop.trf.xlu0
        %v1784 = vpop.trf.xlu0
        %v1786 = vsel %vm722, %v1769, 0
        %v1789 = vsel %vm722, %v1770, 0
        %v1792 = vsel %vm722, %v1771, 0
        %v1795 = vsel %vm722, %v1772, 0
        %v1798 = vsel %vm722, %v1773, 0
        %v1801 = vsel %vm722, %v1774, 0
        %v1804 = vsel %vm722, %v1775, 0
        %v1807 = vsel %vm722, %v1776, 0
        %1809 = vmatprep.subr.mxu0 0.0
        %1810 = vmatpush1.msra.mxu0 %v667
        %1811 = vmatprep.subr.mxu0 0.0
        %1812 = vmatpush1.msra.mxu0 0.0
        %1813 = vmatprep.subr.mxu0 0.0
        %1814 = vmatpush1.msra.mxu0 0.0
        %1815 = vmatprep.subr.mxu0 0.0
        %1816 = vmatpush1.msra.mxu0 0.0
        %1817 = vmatprep.subr.mxu0 0.0
        %1818 = vmatpush1.msra.mxu0 0.0
        %1819 = vmatprep.subr.mxu0 0.0
        %1820 = vmatpush1.msra.mxu0 0.0
        %1821 = vmatprep.subr.mxu0 0.0
        %1822 = vmatpush1.msra.mxu0 0.0
        %1823 = vmatprep.subr.mxu0 0.0
        %1824 = vmatpush1.msra.mxu0 0.0
        %1825 = vmatprep.subr.mxu0 0.0
        %1826 = vmatpush1.msra.mxu0 0.0
        %1827 = vmatprep.subr.mxu0 0.0
        %1828 = vmatpush1.msra.mxu0 0.0
        %1829 = vmatprep.subr.mxu0 0.0
        %1830 = vmatpush1.msra.mxu0 0.0
        %1831 = vmatprep.subr.mxu0 0.0
        %1832 = vmatpush1.msra.mxu0 0.0
        %1833 = vmatprep.subr.mxu0 0.0
        %1834 = vmatpush1.msra.mxu0 0.0
        %1835 = vmatprep.subr.mxu0 0.0
        %1836 = vmatpush1.msra.mxu0 0.0
        %1837 = vmatprep.subr.mxu0 0.0
        %1838 = vmatpush1.msra.mxu0 0.0
        %1839 = vmatprep.subr.mxu0 0.0
        %1840 = vmatpush1.msra.mxu0 0.0
        %1841 = vmatprep.subr.mxu0 0.0
        %1842 = vmatpush1.msra.mxu0 0.0
        %1843 = vmatprep.subr.mxu0 0.0
        %1844 = vmatpush1.msra.mxu0 0.0
        %1845 = vmatprep.subr.mxu0 0.0
        %1846 = vmatpush1.msra.mxu0 0.0
        %1847 = vmatprep.subr.mxu0 0.0
        %1848 = vmatpush1.msra.mxu0 0.0
        %1849 = vmatprep.subr.mxu0 0.0
        %1850 = vmatpush1.msra.mxu0 0.0
        %1851 = vmatprep.subr.mxu0 0.0
        %1852 = vmatpush1.msra.mxu0 0.0
        %1853 = vmatprep.subr.mxu0 0.0
        %1854 = vmatpush1.msra.mxu0 0.0
        %1855 = vmatprep.subr.mxu0 0.0
        %1856 = vmatpush1.msra.mxu0 0.0
        %1857 = vmatprep.subr.mxu0 0.0
        %1858 = vmatpush1.msra.mxu0 0.0
        %1859 = vmatprep.subr.mxu0 0.0
        %1860 = vmatpush1.msra.mxu0 0.0
        %1861 = vmatprep.subr.mxu0 0.0
        %1862 = vmatpush1.msra.mxu0 0.0
        %1863 = vmatprep.subr.mxu0 0.0
        %1864 = vmatpush1.msra.mxu0 0.0
        %1865 = vmatprep.subr.mxu0 0.0
        %1866 = vmatpush1.msra.mxu0 0.0
        %1867 = vmatprep.subr.mxu0 0.0
        %1868 = vmatpush1.msra.mxu0 0.0
        %1869 = vmatprep.subr.mxu0 0.0
        %1870 = vmatpush1.msra.mxu0 0.0
        %1871 = vmatprep.subr.mxu0 0.0
        %1872 = vmatpush1.msra.mxu0 0.0
        %1873 = vmatprep.mubr.f32.mxu0 0.0
        %1874 = vmatmul.mubr.f32.gmra.mrb[0].mxu0 %v1786
        %v1875 = vpop.f32.mrb[0].mxu0
        %v1876 = vadd.f32 0.0, %v1875
        %v1877 = vpop.f32.mrb[0].mxu0
        %1878 = vmatprep.mubr.f32.mxu0 0.0
        %1879 = vmatmul.mubr.f32.gmra.mrb[0].mxu0 %v1789
        %v1880 = vpop.f32.mrb[0].mxu0
        %v1881 = vadd.f32 0.0, %v1880
        %v1882 = vpop.f32.mrb[0].mxu0
        %1883 = vmatprep.mubr.f32.mxu0 0.0
        %1884 = vmatmul.mubr.f32.gmra.mrb[0].mxu0 %v1792
        %v1885 = vpop.f32.mrb[0].mxu0
        %v1886 = vadd.f32 0.0, %v1885
        %v1887 = vpop.f32.mrb[0].mxu0
        %1888 = vmatprep.mubr.f32.mxu0 0.0
        %1889 = vmatmul.mubr.f32.gmra.mrb[0].mxu0 %v1795
        %v1890 = vpop.f32.mrb[0].mxu0
        %v1891 = vadd.f32 0.0, %v1890
        %v1892 = vpop.f32.mrb[0].mxu0
        %1893 = vmatprep.mubr.f32.mxu0 0.0
        %1894 = vmatmul.mubr.f32.gmra.mrb[0].mxu0 %v1798
        %v1895 = vpop.f32.mrb[0].mxu0
        %v1896 = vadd.f32 0.0, %v1895
        %v1897 = vpop.f32.mrb[0].mxu0
        %1898 = vmatprep.mubr.f32.mxu0 0.0
        %1899 = vmatmul.mubr.f32.gmra.mrb[0].mxu0 %v1801
        %v1900 = vpop.f32.mrb[0].mxu0
        %v1901 = vadd.f32 0.0, %v1900
        %v1902 = vpop.f32.mrb[0].mxu0
        %1903 = vmatprep.mubr.f32.mxu0 0.0
        %1904 = vmatmul.mubr.f32.gmra.mrb[0].mxu0 %v1804
        %v1905 = vpop.f32.mrb[0].mxu0
        %v1906 = vadd.f32 0.0, %v1905
        %v1907 = vpop.f32.mrb[0].mxu0
        %1908 = vmatprep.mubr.f32.mxu0 0.0
        %1909 = vmatmul.mubr.f32.gmra.mrb[0].mxu0 %v1807
        %v1910 = vpop.f32.mrb[0].mxu0
        %v1911 = vadd.f32 0.0, %v1910
        %v1912 = vpop.f32.mrb[0].mxu0
        %1913 = vdwg.mxu0
        %v1914 = vmul.f32 %v1876, 0.35355338
        %v1915 = vmul.f32 %v1881, 0.35355338
        %v1916 = vmul.f32 %v1886, 0.35355338
        %v1917 = vmul.f32 %v1891, 0.35355338
        %v1918 = vmul.f32 %v1896, 0.35355338
        %v1919 = vmul.f32 %v1901, 0.35355338
        %v1920 = vmul.f32 %v1906, 0.35355338
        %v1921 = vmul.f32 %v1911, 0.35355338
        %v1922 = vsel %vm424, %v1914, -inf
        %1923 = vmax.xlane.f32.xlu0 %v1922
        %v1924 = vpop.xlane.xlu0 %1923
        %v1925 = vsel %vm424, %v1915, -inf
        %1926 = vmax.xlane.f32.xlu0 %v1925
        %v1927 = vpop.xlane.xlu0 %1926
        %v1928 = vsel %vm424, %v1916, -inf
        %1929 = vmax.xlane.f32.xlu0 %v1928
        %v1930 = vpop.xlane.xlu0 %1929
        %v1931 = vsel %vm424, %v1917, -inf
        %1932 = vmax.xlane.f32.xlu0 %v1931
        %v1933 = vpop.xlane.xlu0 %1932
        %v1934 = vsel %vm424, %v1918, -inf
        %1935 = vmax.xlane.f32.xlu0 %v1934
        %v1936 = vpop.xlane.xlu0 %1935
        %v1937 = vsel %vm424, %v1919, -inf
        %1938 = vmax.xlane.f32.xlu0 %v1937
        %v1939 = vpop.xlane.xlu0 %1938
        %v1940 = vsel %vm424, %v1920, -inf
        %1941 = vmax.xlane.f32.xlu0 %v1940
        %v1942 = vpop.xlane.xlu0 %1941
        %v1943 = vsel %vm424, %v1921, -inf
        %1944 = vmax.xlane.f32.xlu0 %v1943
        %v1945 = vpop.xlane.xlu0 %1944
        %v1946 = vsub.f32 %v1914, %v1924
        %v1947 = vsub.f32 %v1915, %v1927
        %v1948 = vsub.f32 %v1916, %v1930
        %v1949 = vsub.f32 %v1917, %v1933
        %v1950 = vsub.f32 %v1918, %v1936
        %v1951 = vsub.f32 %v1919, %v1939
        %v1952 = vsub.f32 %v1920, %v1942
        %v1953 = vsub.f32 %v1921, %v1945
        %v1954 = vmul.f32 %v1946, 1.442695
        %v1955 = vpow.pop %v1954
        %v1956 = vmul.f32 %v1947, 1.442695
        %v1957 = vpow.pop %v1956
        %v1958 = vmul.f32 %v1948, 1.442695
        %v1959 = vpow.pop %v1958
        %v1960 = vmul.f32 %v1949, 1.442695
        %v1961 = vpow.pop %v1960
        %v1962 = vmul.f32 %v1950, 1.442695
        %v1963 = vpow.pop %v1962
        %v1964 = vmul.f32 %v1951, 1.442695
        %v1965 = vpow.pop %v1964
        %v1966 = vmul.f32 %v1952, 1.442695
        %v1967 = vpow.pop %v1966
        %v1968 = vmul.f32 %v1953, 1.442695
        %v1969 = vpow.pop %v1968
        %v1970 = vsel %vm424, %v1955, 0.0
        %1971 = vadd.xlane.f32.xlu0 %v1970
        %v1972 = vpop.xlane.xlu0 %1971
        %v1973 = vsel %vm424, %v1957, 0.0
        %1974 = vadd.xlane.f32.xlu0 %v1973
        %v1975 = vpop.xlane.xlu0 %1974
        %v1976 = vsel %vm424, %v1959, 0.0
        %1977 = vadd.xlane.f32.xlu0 %v1976
        %v1978 = vpop.xlane.xlu0 %1977
        %v1979 = vsel %vm424, %v1961, 0.0
        %1980 = vadd.xlane.f32.xlu0 %v1979
        %v1981 = vpop.xlane.xlu0 %1980
        %v1982 = vsel %vm424, %v1963, 0.0
        %1983 = vadd.xlane.f32.xlu0 %v1982
        %v1984 = vpop.xlane.xlu0 %1983
        %v1985 = vsel %vm424, %v1965, 0.0
        %1986 = vadd.xlane.f32.xlu0 %v1985
        %v1987 = vpop.xlane.xlu0 %1986
        %v1988 = vsel %vm424, %v1967, 0.0
        %1989 = vadd.xlane.f32.xlu0 %v1988
        %v1990 = vpop.xlane.xlu0 %1989
        %v1991 = vsel %vm424, %v1969, 0.0
        %1992 = vadd.xlane.f32.xlu0 %v1991
        %v1993 = vpop.xlane.xlu0 %1992
        %v1994 = vrcp.pop %v1972
        %v1995 = vmul.f32 %v1955, %v1994
        %v1996 = vrcp.pop %v1975
        %v1997 = vmul.f32 %v1957, %v1996
        %v1998 = vrcp.pop %v1978
        %v1999 = vmul.f32 %v1959, %v1998
        %v2000 = vrcp.pop %v1981
        %v2001 = vmul.f32 %v1961, %v2000
        %v2002 = vrcp.pop %v1984
        %v2003 = vmul.f32 %v1963, %v2002
        %v2004 = vrcp.pop %v1987
        %v2005 = vmul.f32 %v1965, %v2004
        %v2006 = vrcp.pop %v1990
        %v2007 = vmul.f32 %v1967, %v2006
        %v2008 = vrcp.pop %v1993
        %v2009 = vmul.f32 %v1969, %v2008
        %v2011 = vsel %vm424, %v687, 0
        %v2014 = vsel %vm424, %v1995, 0
        %v2017 = vsel %vm424, %v1997, 0
        %v2020 = vsel %vm424, %v1999, 0
        %v2023 = vsel %vm424, %v2001, 0
        %v2026 = vsel %vm424, %v2003, 0
        %v2029 = vsel %vm424, %v2005, 0
        %v2032 = vsel %vm424, %v2007, 0
        %v2035 = vsel %vm424, %v2009, 0
        %2037 = vmatprep.subr.mxu0 0.0
        %2038 = vmatpush1.xpose.msra.mxu0 %v2014
        %2039 = vmatprep.subr.mxu0 0.0
        %2040 = vmatpush1.xpose.msra.mxu0 %v2017
        %2041 = vmatprep.subr.mxu0 0.0
        %2042 = vmatpush1.xpose.msra.mxu0 %v2020
        %2043 = vmatprep.subr.mxu0 0.0
        %2044 = vmatpush1.xpose.msra.mxu0 %v2023
        %2045 = vmatprep.subr.mxu0 0.0
        %2046 = vmatpush1.xpose.msra.mxu0 %v2026
        %2047 = vmatprep.subr.mxu0 0.0
        %2048 = vmatpush1.xpose.msra.mxu0 %v2029
        %2049 = vmatprep.subr.mxu0 0.0
        %2050 = vmatpush1.xpose.msra.mxu0 %v2032
        %2051 = vmatprep.subr.mxu0 0.0
        %2052 = vmatpush1.xpose.msra.mxu0 %v2035
        %2053 = vmatprep.subr.mxu0 0.0
        %2054 = vmatpush1.xpose.msra.mxu0 0.0
        %2055 = vmatprep.subr.mxu0 0.0
        %2056 = vmatpush1.xpose.msra.mxu0 0.0
        %2057 = vmatprep.subr.mxu0 0.0
        %2058 = vmatpush1.xpose.msra.mxu0 0.0
        %2059 = vmatprep.subr.mxu0 0.0
        %2060 = vmatpush1.xpose.msra.mxu0 0.0
        %2061 = vmatprep.subr.mxu0 0.0
        %2062 = vmatpush1.xpose.msra.mxu0 0.0
        %2063 = vmatprep.subr.mxu0 0.0
        %2064 = vmatpush1.xpose.msra.mxu0 0.0
        %2065 = vmatprep.subr.mxu0 0.0
        %2066 = vmatpush1.xpose.msra.mxu0 0.0
        %2067 = vmatprep.subr.mxu0 0.0
        %2068 = vmatpush1.xpose.msra.mxu0 0.0
        %2069 = vmatprep.subr.mxu0 0.0
        %2070 = vmatpush1.xpose.msra.mxu0 0.0
        %2071 = vmatprep.subr.mxu0 0.0
        %2072 = vmatpush1.xpose.msra.mxu0 0.0
        %2073 = vmatprep.subr.mxu0 0.0
        %2074 = vmatpush1.xpose.msra.mxu0 0.0
        %2075 = vmatprep.subr.mxu0 0.0
        %2076 = vmatpush1.xpose.msra.mxu0 0.0
        %2077 = vmatprep.subr.mxu0 0.0
        %2078 = vmatpush1.xpose.msra.mxu0 0.0
        %2079 = vmatprep.subr.mxu0 0.0
        %2080 = vmatpush1.xpose.msra.mxu0 0.0
        %2081 = vmatprep.subr.mxu0 0.0
        %2082 = vmatpush1.xpose.msra.mxu0 0.0
        %2083 = vmatprep.subr.mxu0 0.0
        %2084 = vmatpush1.xpose.msra.mxu0 0.0
        %2085 = vmatprep.subr.mxu0 0.0
        %2086 = vmatpush1.xpose.msra.mxu0 0.0
        %2087 = vmatprep.subr.mxu0 0.0
        %2088 = vmatpush1.xpose.msra.mxu0 0.0
        %2089 = vmatprep.subr.mxu0 0.0
        %2090 = vmatpush1.xpose.msra.mxu0 0.0
        %2091 = vmatprep.subr.mxu0 0.0
        %2092 = vmatpush1.xpose.msra.mxu0 0.0
        %2093 = vmatprep.subr.mxu0 0.0
        %2094 = vmatpush1.xpose.msra.mxu0 0.0
        %2095 = vmatprep.subr.mxu0 0.0
        %2096 = vmatpush1.xpose.msra.mxu0 0.0
        %2097 = vmatprep.subr.mxu0 0.0
        %2098 = vmatpush1.xpose.msra.mxu0 0.0
        %2099 = vmatprep.subr.mxu0 0.0
        %2100 = vmatpush1.xpose.msra.mxu0 0.0
        %2101 = vmatprep.mubr.f32.mxu0 0.0
        %2102 = vmatmul.mubr.f32.gmra.mrb[0].mxu0 %v2011
        %v2103 = vpop.f32.mrb[0].mxu0
        %v2104 = vadd.f32 0.0, %v2103
        %v2105 = vpop.f32.mrb[0].mxu0
        %2106 = vdwg.mxu0
        %v2107 = vld [vmem:[%s4] sm:$0xff]
        %v2108 = vld [vmem:[%s4 + $0x8] sm:$0xff]
        %v2109 = vld [vmem:[%s4 + $0x10] sm:$0xff]
        %v2110 = vld [vmem:[%s4 + $0x18] sm:$0xff]
        %v2112 = vsel %vm528, %v2107, 0
        %v2115 = vsel %vm528, %v2108, 0
        %v2118 = vsel %vm528, %v2109, 0
        %v2121 = vsel %vm528, %v2110, 0
        %2123 = vmatprep.subr.mxu0 0.0
        %2124 = vmatpush1.msra.mxu0 %v1042
        %2125 = vmatprep.subr.mxu0 0.0
        %2126 = vmatpush1.msra.mxu0 %v1396
        %2127 = vmatprep.subr.mxu0 0.0
        %2128 = vmatpush1.msra.mxu0 %v1750
        %2129 = vmatprep.subr.mxu0 0.0
        %2130 = vmatpush1.msra.mxu0 %v2104
        %2131 = vmatprep.subr.mxu0 0.0
        %2132 = vmatpush1.msra.mxu0 0.0
        %2133 = vmatprep.subr.mxu0 0.0
        %2134 = vmatpush1.msra.mxu0 0.0
        %2135 = vmatprep.subr.mxu0 0.0
        %2136 = vmatpush1.msra.mxu0 0.0
        %2137 = vmatprep.subr.mxu0 0.0
        %2138 = vmatpush1.msra.mxu0 0.0
        %2139 = vmatprep.subr.mxu0 0.0
        %2140 = vmatpush1.msra.mxu0 0.0
        %2141 = vmatprep.subr.mxu0 0.0
        %2142 = vmatpush1.msra.mxu0 0.0
        %2143 = vmatprep.subr.mxu0 0.0
        %2144 = vmatpush1.msra.mxu0 0.0
        %2145 = vmatprep.subr.mxu0 0.0
        %2146 = vmatpush1.msra.mxu0 0.0
        %2147 = vmatprep.subr.mxu0 0.0
        %2148 = vmatpush1.msra.mxu0 0.0
        %2149 = vmatprep.subr.mxu0 0.0
        %2150 = vmatpush1.msra.mxu0 0.0
        %2151 = vmatprep.subr.mxu0 0.0
        %2152 = vmatpush1.msra.mxu0 0.0
        %2153 = vmatprep.subr.mxu0 0.0
        %2154 = vmatpush1.msra.mxu0 0.0
        %2155 = vmatprep.subr.mxu0 0.0
        %2156 = vmatpush1.msra.mxu0 0.0
        %2157 = vmatprep.subr.mxu0 0.0
        %2158 = vmatpush1.msra.mxu0 0.0
        %2159 = vmatprep.subr.mxu0 0.0
        %2160 = vmatpush1.msra.mxu0 0.0
        %2161 = vmatprep.subr.mxu0 0.0
        %2162 = vmatpush1.msra.mxu0 0.0
        %2163 = vmatprep.subr.mxu0 0.0
        %2164 = vmatpush1.msra.mxu0 0.0
        %2165 = vmatprep.subr.mxu0 0.0
        %2166 = vmatpush1.msra.mxu0 0.0
        %2167 = vmatprep.subr.mxu0 0.0
        %2168 = vmatpush1.msra.mxu0 0.0
        %2169 = vmatprep.subr.mxu0 0.0
        %2170 = vmatpush1.msra.mxu0 0.0
        %2171 = vmatprep.subr.mxu0 0.0
        %2172 = vmatpush1.msra.mxu0 0.0
        %2173 = vmatprep.subr.mxu0 0.0
        %2174 = vmatpush1.msra.mxu0 0.0
        %2175 = vmatprep.subr.mxu0 0.0
        %2176 = vmatpush1.msra.mxu0 0.0
        %2177 = vmatprep.subr.mxu0 0.0
        %2178 = vmatpush1.msra.mxu0 0.0
        %2179 = vmatprep.subr.mxu0 0.0
        %2180 = vmatpush1.msra.mxu0 0.0
        %2181 = vmatprep.subr.mxu0 0.0
        %2182 = vmatpush1.msra.mxu0 0.0
        %2183 = vmatprep.subr.mxu0 0.0
        %2184 = vmatpush1.msra.mxu0 0.0
        %2185 = vmatprep.subr.mxu0 0.0
        %2186 = vmatpush1.msra.mxu0 0.0
        %2187 = vmatprep.mubr.f32.mxu0 0.0
        %2188 = vmatmul.mubr.f32.gmra.mrb[0].mxu0 %v2112
        %v2189 = vpop.f32.mrb[0].mxu0
        %v2190 = vadd.f32 0.0, %v2189
        %v2191 = vpop.f32.mrb[0].mxu0
        %2192 = vmatprep.mubr.f32.mxu0 0.0
        %2193 = vmatmul.mubr.f32.gmra.mrb[0].mxu0 %v2115
        %v2194 = vpop.f32.mrb[0].mxu0
        %v2195 = vadd.f32 0.0, %v2194
        %v2196 = vpop.f32.mrb[0].mxu0
        %2197 = vmatprep.mubr.f32.mxu0 0.0
        %2198 = vmatmul.mubr.f32.gmra.mrb[0].mxu0 %v2118
        %v2199 = vpop.f32.mrb[0].mxu0
        %v2200 = vadd.f32 0.0, %v2199
        %v2201 = vpop.f32.mrb[0].mxu0
        %2202 = vmatprep.mubr.f32.mxu0 0.0
        %2203 = vmatmul.mubr.f32.gmra.mrb[0].mxu0 %v2121
        %v2204 = vpop.f32.mrb[0].mxu0
        %v2205 = vadd.f32 0.0, %v2204
        %v2206 = vpop.f32.mrb[0].mxu0
        %2207 = vdwg.mxu0
        %v2208 = vadd.f32 %v412, %v2190
        %v2209 = vadd.f32 %v413, %v2195
        %v2210 = vadd.f32 %v414, %v2200
        %v2211 = vadd.f32 %v415, %v2205
        %v2212 = vld [vmem:[%s5] sm:$0xff]
        %v2213 = vld [vmem:[%s5 + $0x8] sm:$0xff]
        %v2214 = vld [vmem:[%s5 + $0x10] sm:$0xff]
        %v2215 = vld [vmem:[%s5 + $0x18] sm:$0xff]
        %2217 = vset.pattern.permute.xlu0 0
        %2218 = vperm.xlu0 %2217, %v2212
        %v2219 = vpop.permute.xlu0 %2218
        %2222 = vset.pattern.permute.xlu0 0
        %2223 = vperm.xlu0 %2222, %v2213
        %v2224 = vpop.permute.xlu0 %2223
        %2227 = vset.pattern.permute.xlu0 0
        %2228 = vperm.xlu0 %2227, %v2214
        %v2229 = vpop.permute.xlu0 %2228
        %2232 = vset.pattern.permute.xlu0 0
        %2233 = vperm.xlu0 %2232, %v2215
        %v2234 = vpop.permute.xlu0 %2233
        %v2236 = vadd.f32 %v2208, %v2219
        %v2237 = vadd.f32 %v2209, %v2224
        %v2238 = vadd.f32 %v2210, %v2229
        %v2239 = vadd.f32 %v2211, %v2234
        %v2240 = vld [vmem:[%s6] sm:$0xff]
        %v2241 = vld [vmem:[%s6 + $0x8] sm:$0xff]
        %v2242 = vld [vmem:[%s6 + $0x10] sm:$0xff]
        %v2243 = vld [vmem:[%s6 + $0x18] sm:$0xff]
        %v2244 = vld [vmem:[%s7] sm:$0xff]
        %v2245 = vld [vmem:[%s7 + $0x8] sm:$0xff]
        %v2246 = vld [vmem:[%s7 + $0x10] sm:$0xff]
        %v2247 = vld [vmem:[%s7 + $0x18] sm:$0xff]
        %v2248 = vsel %vm424, %v2236, 0.0
        %v2249 = vsel %vm424, %v2237, 0.0
        %v2250 = vadd.f32 %v2248, %v2249
        %v2251 = vsel %vm424, %v2238, 0.0
        %v2252 = vadd.f32 %v2250, %v2251
        %v2253 = vsel %vm424, %v2239, 0.0
        %v2254 = vadd.f32 %v2252, %v2253
        %v2255 = vrot.slane %v2254, 4
        %v2256 = vadd.f32 %v2254, %v2255
        %v2257 = vrot.slane %v2256, 2
        %v2258 = vadd.f32 %v2256, %v2257
        %v2259 = vrot.slane %v2258, 1
        %v2260 = vadd.f32 %v2258, %v2259
        %v2261 = vmul.f32 %v2260, %v438
        %v2262 = vsub.f32 %v2236, %v2261
        %v2263 = vsub.f32 %v2237, %v2261
        %v2264 = vsub.f32 %v2238, %v2261
        %v2265 = vsub.f32 %v2239, %v2261
        %v2266 = vmul.f32 %v2262, %v2262
        %v2267 = vmul.f32 %v2263, %v2263
        %v2268 = vmul.f32 %v2264, %v2264
        %v2269 = vmul.f32 %v2265, %v2265
        %v2270 = vsel %vm424, %v2266, 0.0
        %v2271 = vsel %vm424, %v2267, 0.0
        %v2272 = vadd.f32 %v2270, %v2271
        %v2273 = vsel %vm424, %v2268, 0.0
        %v2274 = vadd.f32 %v2272, %v2273
        %v2275 = vsel %vm424, %v2269, 0.0
        %v2276 = vadd.f32 %v2274, %v2275
        %v2277 = vrot.slane %v2276, 4
        %v2278 = vadd.f32 %v2276, %v2277
        %v2279 = vrot.slane %v2278, 2
        %v2280 = vadd.f32 %v2278, %v2279
        %v2281 = vrot.slane %v2280, 1
        %v2282 = vadd.f32 %v2280, %v2281
        %v2283 = vmul.f32 %v2282, %v438
        %v2284 = vadd.f32 %v2283, 1e-05
        %v2285 = vrsqrt.pop %v2284
        %v2286 = vmul.f32 %v2262, %v2285
        %v2287 = vmul.f32 %v2263, %v2285
        %v2288 = vmul.f32 %v2264, %v2285
        %v2289 = vmul.f32 %v2265, %v2285
        %2291 = vset.pattern.permute.xlu0 0
        %2292 = vperm.xlu0 %2291, %v2240
        %v2293 = vpop.permute.xlu0 %2292
        %2296 = vset.pattern.permute.xlu0 0
        %2297 = vperm.xlu0 %2296, %v2241
        %v2298 = vpop.permute.xlu0 %2297
        %2301 = vset.pattern.permute.xlu0 0
        %2302 = vperm.xlu0 %2301, %v2242
        %v2303 = vpop.permute.xlu0 %2302
        %2306 = vset.pattern.permute.xlu0 0
        %2307 = vperm.xlu0 %2306, %v2243
        %v2308 = vpop.permute.xlu0 %2307
        %v2310 = vmul.f32 %v2286, %v2293
        %v2311 = vmul.f32 %v2287, %v2298
        %v2312 = vmul.f32 %v2288, %v2303
        %v2313 = vmul.f32 %v2289, %v2308
        %2315 = vset.pattern.permute.xlu0 0
        %2316 = vperm.xlu0 %2315, %v2244
        %v2317 = vpop.permute.xlu0 %2316
        %2320 = vset.pattern.permute.xlu0 0
        %2321 = vperm.xlu0 %2320, %v2245
        %v2322 = vpop.permute.xlu0 %2321
        %2325 = vset.pattern.permute.xlu0 0
        %2326 = vperm.xlu0 %2325, %v2246
        %v2327 = vpop.permute.xlu0 %2326
        %2330 = vset.pattern.permute.xlu0 0
        %2331 = vperm.xlu0 %2330, %v2247
        %v2332 = vpop.permute.xlu0 %2331
        %v2334 = vadd.f32 %v2310, %v2317
        %v2335 = vadd.f32 %v2311, %v2322
        %v2336 = vadd.f32 %v2312, %v2327
        %v2337 = vadd.f32 %v2313, %v2332
        %v2338 = vld [vmem:[%s8] sm:$0xff]
        %v2339 = vld [vmem:[%s8 + $0x8] sm:$0xff]
        %v2340 = vld [vmem:[%s8 + $0x10] sm:$0xff]
        %v2341 = vld [vmem:[%s8 + $0x18] sm:$0xff]
        %v2342 = vld [vmem:[%s8 + $0x20] sm:$0xff]
        %v2343 = vld [vmem:[%s8 + $0x28] sm:$0xff]
        %v2344 = vld [vmem:[%s8 + $0x30] sm:$0xff]
        %v2345 = vld [vmem:[%s8 + $0x38] sm:$0xff]
        %v2346 = vld [vmem:[%s8 + $0x40] sm:$0xff]
        %v2347 = vld [vmem:[%s8 + $0x48] sm:$0xff]
        %v2348 = vld [vmem:[%s8 + $0x50] sm:$0xff]
        %v2349 = vld [vmem:[%s8 + $0x58] sm:$0xff]
        %v2350 = vld [vmem:[%s8 + $0x60] sm:$0xff]
        %v2351 = vld [vmem:[%s8 + $0x68] sm:$0xff]
        %v2352 = vld [vmem:[%s8 + $0x70] sm:$0xff]
        %v2353 = vld [vmem:[%s8 + $0x78] sm:$0xff]
        %v2354 = vld [vmem:[%s9] sm:$0xff]
        %v2355 = vld [vmem:[%s9 + $0x8] sm:$0xff]
        %v2356 = vld [vmem:[%s9 + $0x10] sm:$0xff]
        %v2357 = vld [vmem:[%s9 + $0x18] sm:$0xff]
        %v2358 = vld [vmem:[%s9 + $0x20] sm:$0xff]
        %v2359 = vld [vmem:[%s9 + $0x28] sm:$0xff]
        %v2360 = vld [vmem:[%s9 + $0x30] sm:$0xff]
        %v2361 = vld [vmem:[%s9 + $0x38] sm:$0xff]
        %v2362 = vld [vmem:[%s9 + $0x40] sm:$0xff]
        %v2363 = vld [vmem:[%s9 + $0x48] sm:$0xff]
        %v2364 = vld [vmem:[%s9 + $0x50] sm:$0xff]
        %v2365 = vld [vmem:[%s9 + $0x58] sm:$0xff]
        %v2366 = vld [vmem:[%s9 + $0x60] sm:$0xff]
        %v2367 = vld [vmem:[%s9 + $0x68] sm:$0xff]
        %v2368 = vld [vmem:[%s9 + $0x70] sm:$0xff]
        %v2369 = vld [vmem:[%s9 + $0x78] sm:$0xff]
        %2371 = vset.pattern.permute.xlu0 0
        %2372 = vperm.xlu0 %2371, %v2354
        %v2373 = vpop.permute.xlu0 %2372
        %2376 = vset.pattern.permute.xlu0 0
        %2377 = vperm.xlu0 %2376, %v2355
        %v2378 = vpop.permute.xlu0 %2377
        %2381 = vset.pattern.permute.xlu0 0
        %2382 = vperm.xlu0 %2381, %v2356
        %v2383 = vpop.permute.xlu0 %2382
        %2386 = vset.pattern.permute.xlu0 0
        %2387 = vperm.xlu0 %2386, %v2357
        %v2388 = vpop.permute.xlu0 %2387
        %2391 = vset.pattern.permute.xlu0 0
        %2392 = vperm.xlu0 %2391, %v2358
        %v2393 = vpop.permute.xlu0 %2392
        %2396 = vset.pattern.permute.xlu0 0
        %2397 = vperm.xlu0 %2396, %v2359
        %v2398 = vpop.permute.xlu0 %2397
        %2401 = vset.pattern.permute.xlu0 0
        %2402 = vperm.xlu0 %2401, %v2360
        %v2403 = vpop.permute.xlu0 %2402
        %2406 = vset.pattern.permute.xlu0 0
        %2407 = vperm.xlu0 %2406, %v2361
        %v2408 = vpop.permute.xlu0 %2407
        %2411 = vset.pattern.permute.xlu0 0
        %2412 = vperm.xlu0 %2411, %v2362
        %v2413 = vpop.permute.xlu0 %2412
        %2416 = vset.pattern.permute.xlu0 0
        %2417 = vperm.xlu0 %2416, %v2363
        %v2418 = vpop.permute.xlu0 %2417
        %2421 = vset.pattern.permute.xlu0 0
        %2422 = vperm.xlu0 %2421, %v2364
        %v2423 = vpop.permute.xlu0 %2422
        %2426 = vset.pattern.permute.xlu0 0
        %2427 = vperm.xlu0 %2426, %v2365
        %v2428 = vpop.permute.xlu0 %2427
        %2431 = vset.pattern.permute.xlu0 0
        %2432 = vperm.xlu0 %2431, %v2366
        %v2433 = vpop.permute.xlu0 %2432
        %2436 = vset.pattern.permute.xlu0 0
        %2437 = vperm.xlu0 %2436, %v2367
        %v2438 = vpop.permute.xlu0 %2437
        %2441 = vset.pattern.permute.xlu0 0
        %2442 = vperm.xlu0 %2441, %v2368
        %v2443 = vpop.permute.xlu0 %2442
        %2446 = vset.pattern.permute.xlu0 0
        %2447 = vperm.xlu0 %2446, %v2369
        %v2448 = vpop.permute.xlu0 %2447
        %v2451 = vsel %vm528, %v2338, 0
        %v2454 = vsel %vm528, %v2339, 0
        %v2457 = vsel %vm528, %v2340, 0
        %v2460 = vsel %vm528, %v2341, 0
        %v2463 = vsel %vm528, %v2342, 0
        %v2466 = vsel %vm528, %v2343, 0
        %v2469 = vsel %vm528, %v2344, 0
        %v2472 = vsel %vm528, %v2345, 0
        %v2475 = vsel %vm528, %v2346, 0
        %v2478 = vsel %vm528, %v2347, 0
        %v2481 = vsel %vm528, %v2348, 0
        %v2484 = vsel %vm528, %v2349, 0
        %v2487 = vsel %vm528, %v2350, 0
        %v2490 = vsel %vm528, %v2351, 0
        %v2493 = vsel %vm528, %v2352, 0
        %v2496 = vsel %vm528, %v2353, 0
        %2498 = vmatprep.subr.mxu0 0.0
        %2499 = vmatpush1.msra.mxu0 %v2334
        %2500 = vmatprep.subr.mxu0 0.0
        %2501 = vmatpush1.msra.mxu0 %v2335
        %2502 = vmatprep.subr.mxu0 0.0
        %2503 = vmatpush1.msra.mxu0 %v2336
        %2504 = vmatprep.subr.mxu0 0.0
        %2505 = vmatpush1.msra.mxu0 %v2337
        %2506 = vmatprep.subr.mxu0 0.0
        %2507 = vmatpush1.msra.mxu0 0.0
        %2508 = vmatprep.subr.mxu0 0.0
        %2509 = vmatpush1.msra.mxu0 0.0
        %2510 = vmatprep.subr.mxu0 0.0
        %2511 = vmatpush1.msra.mxu0 0.0
        %2512 = vmatprep.subr.mxu0 0.0
        %2513 = vmatpush1.msra.mxu0 0.0
        %2514 = vmatprep.subr.mxu0 0.0
        %2515 = vmatpush1.msra.mxu0 0.0
        %2516 = vmatprep.subr.mxu0 0.0
        %2517 = vmatpush1.msra.mxu0 0.0
        %2518 = vmatprep.subr.mxu0 0.0
        %2519 = vmatpush1.msra.mxu0 0.0
        %2520 = vmatprep.subr.mxu0 0.0
        %2521 = vmatpush1.msra.mxu0 0.0
        %2522 = vmatprep.subr.mxu0 0.0
        %2523 = vmatpush1.msra.mxu0 0.0
        %2524 = vmatprep.subr.mxu0 0.0
        %2525 = vmatpush1.msra.mxu0 0.0
        %2526 = vmatprep.subr.mxu0 0.0
        %2527 = vmatpush1.msra.mxu0 0.0
        %2528 = vmatprep.subr.mxu0 0.0
        %2529 = vmatpush1.msra.mxu0 0.0
        %2530 = vmatprep.subr.mxu0 0.0
        %2531 = vmatpush1.msra.mxu0 0.0
        %2532 = vmatprep.subr.mxu0 0.0
        %2533 = vmatpush1.msra.mxu0 0.0
        %2534 = vmatprep.subr.mxu0 0.0
        %2535 = vmatpush1.msra.mxu0 0.0
        %2536 = vmatprep.subr.mxu0 0.0
        %2537 = vmatpush1.msra.mxu0 0.0
        %2538 = vmatprep.subr.mxu0 0.0
        %2539 = vmatpush1.msra.mxu0 0.0
        %2540 = vmatprep.subr.mxu0 0.0
        %2541 = vmatpush1.msra.mxu0 0.0
        %2542 = vmatprep.subr.mxu0 0.0
        %2543 = vmatpush1.msra.mxu0 0.0
        %2544 = vmatprep.subr.mxu0 0.0
        %2545 = vmatpush1.msra.mxu0 0.0
        %2546 = vmatprep.subr.mxu0 0.0
        %2547 = vmatpush1.msra.mxu0 0.0
        %2548 = vmatprep.subr.mxu0 0.0
        %2549 = vmatpush1.msra.mxu0 0.0
        %2550 = vmatprep.subr.mxu0 0.0
        %2551 = vmatpush1.msra.mxu0 0.0
        %2552 = vmatprep.subr.mxu0 0.0
        %2553 = vmatpush1.msra.mxu0 0.0
        %2554 = vmatprep.subr.mxu0 0.0
        %2555 = vmatpush1.msra.mxu0 0.0
        %2556 = vmatprep.subr.mxu0 0.0
        %2557 = vmatpush1.msra.mxu0 0.0
        %2558 = vmatprep.subr.mxu0 0.0
        %2559 = vmatpush1.msra.mxu0 0.0
        %2560 = vmatprep.subr.mxu0 0.0
        %2561 = vmatpush1.msra.mxu0 0.0
        %2562 = vmatprep.mubr.f32.mxu0 0.0
        %2563 = vmatmul.mubr.f32.gmra.mrb[0].mxu0 %v2451
        %v2564 = vpop.f32.mrb[0].mxu0
        %v2565 = vadd.f32 %v2373, %v2564
        %v2566 = vpop.f32.mrb[0].mxu0
        %2567 = vmatprep.mubr.f32.mxu0 0.0
        %2568 = vmatmul.mubr.f32.gmra.mrb[0].mxu0 %v2454
        %v2569 = vpop.f32.mrb[0].mxu0
        %v2570 = vadd.f32 %v2378, %v2569
        %v2571 = vpop.f32.mrb[0].mxu0
        %2572 = vmatprep.mubr.f32.mxu0 0.0
        %2573 = vmatmul.mubr.f32.gmra.mrb[0].mxu0 %v2457
        %v2574 = vpop.f32.mrb[0].mxu0
        %v2575 = vadd.f32 %v2383, %v2574
        %v2576 = vpop.f32.mrb[0].mxu0
        %2577 = vmatprep.mubr.f32.mxu0 0.0
        %2578 = vmatmul.mubr.f32.gmra.mrb[0].mxu0 %v2460
        %v2579 = vpop.f32.mrb[0].mxu0
        %v2580 = vadd.f32 %v2388, %v2579
        %v2581 = vpop.f32.mrb[0].mxu0
        %2582 = vmatprep.mubr.f32.mxu0 0.0
        %2583 = vmatmul.mubr.f32.gmra.mrb[0].mxu0 %v2463
        %v2584 = vpop.f32.mrb[0].mxu0
        %v2585 = vadd.f32 %v2393, %v2584
        %v2586 = vpop.f32.mrb[0].mxu0
        %2587 = vmatprep.mubr.f32.mxu0 0.0
        %2588 = vmatmul.mubr.f32.gmra.mrb[0].mxu0 %v2466
        %v2589 = vpop.f32.mrb[0].mxu0
        %v2590 = vadd.f32 %v2398, %v2589
        %v2591 = vpop.f32.mrb[0].mxu0
        %2592 = vmatprep.mubr.f32.mxu0 0.0
        %2593 = vmatmul.mubr.f32.gmra.mrb[0].mxu0 %v2469
        %v2594 = vpop.f32.mrb[0].mxu0
        %v2595 = vadd.f32 %v2403, %v2594
        %v2596 = vpop.f32.mrb[0].mxu0
        %2597 = vmatprep.mubr.f32.mxu0 0.0
        %2598 = vmatmul.mubr.f32.gmra.mrb[0].mxu0 %v2472
        %v2599 = vpop.f32.mrb[0].mxu0
        %v2600 = vadd.f32 %v2408, %v2599
        %v2601 = vpop.f32.mrb[0].mxu0
        %2602 = vmatprep.mubr.f32.mxu0 0.0
        %2603 = vmatmul.mubr.f32.gmra.mrb[0].mxu0 %v2475
        %v2604 = vpop.f32.mrb[0].mxu0
        %v2605 = vadd.f32 %v2413, %v2604
        %v2606 = vpop.f32.mrb[0].mxu0
        %2607 = vmatprep.mubr.f32.mxu0 0.0
        %2608 = vmatmul.mubr.f32.gmra.mrb[0].mxu0 %v2478
        %v2609 = vpop.f32.mrb[0].mxu0
        %v2610 = vadd.f32 %v2418, %v2609
        %v2611 = vpop.f32.mrb[0].mxu0
        %2612 = vmatprep.mubr.f32.mxu0 0.0
        %2613 = vmatmul.mubr.f32.gmra.mrb[0].mxu0 %v2481
        %v2614 = vpop.f32.mrb[0].mxu0
        %v2615 = vadd.f32 %v2423, %v2614
        %v2616 = vpop.f32.mrb[0].mxu0
        %2617 = vmatprep.mubr.f32.mxu0 0.0
        %2618 = vmatmul.mubr.f32.gmra.mrb[0].mxu0 %v2484
        %v2619 = vpop.f32.mrb[0].mxu0
        %v2620 = vadd.f32 %v2428, %v2619
        %v2621 = vpop.f32.mrb[0].mxu0
        %2622 = vmatprep.mubr.f32.mxu0 0.0
        %2623 = vmatmul.mubr.f32.gmra.mrb[0].mxu0 %v2487
        %v2624 = vpop.f32.mrb[0].mxu0
        %v2625 = vadd.f32 %v2433, %v2624
        %v2626 = vpop.f32.mrb[0].mxu0
        %2627 = vmatprep.mubr.f32.mxu0 0.0
        %2628 = vmatmul.mubr.f32.gmra.mrb[0].mxu0 %v2490
        %v2629 = vpop.f32.mrb[0].mxu0
        %v2630 = vadd.f32 %v2438, %v2629
        %v2631 = vpop.f32.mrb[0].mxu0
        %2632 = vmatprep.mubr.f32.mxu0 0.0
        %2633 = vmatmul.mubr.f32.gmra.mrb[0].mxu0 %v2493
        %v2634 = vpop.f32.mrb[0].mxu0
        %v2635 = vadd.f32 %v2443, %v2634
        %v2636 = vpop.f32.mrb[0].mxu0
        %2637 = vmatprep.mubr.f32.mxu0 0.0
        %2638 = vmatmul.mubr.f32.gmra.mrb[0].mxu0 %v2496
        %v2639 = vpop.f32.mrb[0].mxu0
        %v2640 = vadd.f32 %v2448, %v2639
        %v2641 = vpop.f32.mrb[0].mxu0
        %2642 = vdwg.mxu0
        %v2643 = vmul.f32 %v2565, 0.5
        %v2644 = vmul.f32 %v2570, 0.5
        %v2645 = vmul.f32 %v2575, 0.5
        %v2646 = vmul.f32 %v2580, 0.5
        %v2647 = vmul.f32 %v2585, 0.5
        %v2648 = vmul.f32 %v2590, 0.5
        %v2649 = vmul.f32 %v2595, 0.5
        %v2650 = vmul.f32 %v2600, 0.5
        %v2651 = vmul.f32 %v2605, 0.5
        %v2652 = vmul.f32 %v2610, 0.5
        %v2653 = vmul.f32 %v2615, 0.5
        %v2654 = vmul.f32 %v2620, 0.5
        %v2655 = vmul.f32 %v2625, 0.5
        %v2656 = vmul.f32 %v2630, 0.5
        %v2657 = vmul.f32 %v2635, 0.5
        %v2658 = vmul.f32 %v2640, 0.5
        %v2659 = vmul.f32 %v2565, 0.044715
        %v2660 = vmul.f32 %v2570, 0.044715
        %v2661 = vmul.f32 %v2575, 0.044715
        %v2662 = vmul.f32 %v2580, 0.044715
        %v2663 = vmul.f32 %v2585, 0.044715
        %v2664 = vmul.f32 %v2590, 0.044715
        %v2665 = vmul.f32 %v2595, 0.044715
        %v2666 = vmul.f32 %v2600, 0.044715
        %v2667 = vmul.f32 %v2605, 0.044715
        %v2668 = vmul.f32 %v2610, 0.044715
        %v2669 = vmul.f32 %v2615, 0.044715
        %v2670 = vmul.f32 %v2620, 0.044715
        %v2671 = vmul.f32 %v2625, 0.044715
        %v2672 = vmul.f32 %v2630, 0.044715
        %v2673 = vmul.f32 %v2635, 0.044715
        %v2674 = vmul.f32 %v2640, 0.044715
        %v2675 = vmul.f32 %v2659, %v2565
        %v2676 = vmul.f32 %v2660, %v2570
        %v2677 = vmul.f32 %v2661, %v2575
        %v2678 = vmul.f32 %v2662, %v2580
        %v2679 = vmul.f32 %v2663, %v2585
        %v2680 = vmul.f32 %v2664, %v2590
        %v2681 = vmul.f32 %v2665, %v2595
        %v2682 = vmul.f32 %v2666, %v2600
        %v2683 = vmul.f32 %v2667, %v2605
        %v2684 = vmul.f32 %v2668, %v2610
        %v2685 = vmul.f32 %v2669, %v2615
        %v2686 = vmul.f32 %v2670, %v2620
        %v2687 = vmul.f32 %v2671, %v2625
        %v2688 = vmul.f32 %v2672, %v2630
        %v2689 = vmul.f32 %v2673, %v2635
        %v2690 = vmul.f32 %v2674, %v2640
        %v2691 = vmul.f32 %v2675, %v2565
        %v2692 = vmul.f32 %v2676, %v2570
        %v2693 = vmul.f32 %v2677, %v2575
        %v2694 = vmul.f32 %v2678, %v2580
        %v2695 = vmul.f32 %v2679, %v2585
        %v2696 = vmul.f32 %v2680, %v2590
        %v2697 = vmul.f32 %v2681, %v2595
        %v2698 = vmul.f32 %v2682, %v2600
        %v2699 = vmul.f32 %v2683, %v2605
        %v2700 = vmul.f32 %v2684, %v2610
        %v2701 = vmul.f32 %v2685, %v2615
        %v2702 = vmul.f32 %v2686, %v2620
        %v2703 = vmul.f32 %v2687, %v2625
        %v2704 = vmul.f32 %v2688, %v2630
        %v2705 = vmul.f32 %v2689, %v2635
        %v2706 = vmul.f32 %v2690, %v2640
        %v2707 = vadd.f32 %v2565, %v2691
        %v2708 = vadd.f32 %v2570, %v2692
        %v2709 = vadd.f32 %v2575, %v2693
        %v2710 = vadd.f32 %v2580, %v2694
        %v2711 = vadd.f32 %v2585, %v2695
        %v2712 = vadd.f32 %v2590, %v2696
        %v2713 = vadd.f32 %v2595, %v2697
        %v2714 = vadd.f32 %v2600, %v2698
        %v2715 = vadd.f32 %v2605, %v2699
        %v2716 = vadd.f32 %v2610, %v2700
        %v2717 = vadd.f32 %v2615, %v2701
        %v2718 = vadd.f32 %v2620, %v2702
        %v2719 = vadd.f32 %v2625, %v2703
        %v2720 = vadd.f32 %v2630, %v2704
        %v2721 = vadd.f32 %v2635, %v2705
        %v2722 = vadd.f32 %v2640, %v2706
        %v2723 = vmul.f32 %v2707, 0.7978846
        %v2724 = vmul.f32 %v2708, 0.7978846
        %v2725 = vmul.f32 %v2709, 0.7978846
        %v2726 = vmul.f32 %v2710, 0.7978846
        %v2727 = vmul.f32 %v2711, 0.7978846
        %v2728 = vmul.f32 %v2712, 0.7978846
        %v2729 = vmul.f32 %v2713, 0.7978846
        %v2730 = vmul.f32 %v2714, 0.7978846
        %v2731 = vmul.f32 %v2715, 0.7978846
        %v2732 = vmul.f32 %v2716, 0.7978846
        %v2733 = vmul.f32 %v2717, 0.7978846
        %v2734 = vmul.f32 %v2718, 0.7978846
        %v2735 = vmul.f32 %v2719, 0.7978846
        %v2736 = vmul.f32 %v2720, 0.7978846
        %v2737 = vmul.f32 %v2721, 0.7978846
        %v2738 = vmul.f32 %v2722, 0.7978846
        %v2739 = vtanh.pop %v2723
        %v2740 = vtanh.pop %v2724
        %v2741 = vtanh.pop %v2725
        %v2742 = vtanh.pop %v2726
        %v2743 = vtanh.pop %v2727
        %v2744 = vtanh.pop %v2728
        %v2745 = vtanh.pop %v2729
        %v2746 = vtanh.pop %v2730
        %v2747 = vtanh.pop %v2731
        %v2748 = vtanh.pop %v2732
        %v2749 = vtanh.pop %v2733
        %v2750 = vtanh.pop %v2734
        %v2751 = vtanh.pop %v2735
        %v2752 = vtanh.pop %v2736
        %v2753 = vtanh.pop %v2737
        %v2754 = vtanh.pop %v2738
        %v2755 = vadd.f32 %v2739, 1.0
        %v2756 = vadd.f32 %v2740, 1.0
        %v2757 = vadd.f32 %v2741, 1.0
        %v2758 = vadd.f32 %v2742, 1.0
        %v2759 = vadd.f32 %v2743, 1.0
        %v2760 = vadd.f32 %v2744, 1.0
        %v2761 = vadd.f32 %v2745, 1.0
        %v2762 = vadd.f32 %v2746, 1.0
        %v2763 = vadd.f32 %v2747, 1.0
        %v2764 = vadd.f32 %v2748, 1.0
        %v2765 = vadd.f32 %v2749, 1.0
        %v2766 = vadd.f32 %v2750, 1.0
        %v2767 = vadd.f32 %v2751, 1.0
        %v2768 = vadd.f32 %v2752, 1.0
        %v2769 = vadd.f32 %v2753, 1.0
        %v2770 = vadd.f32 %v2754, 1.0
        %v2771 = vmul.f32 %v2643, %v2755
        %v2772 = vmul.f32 %v2644, %v2756
        %v2773 = vmul.f32 %v2645, %v2757
        %v2774 = vmul.f32 %v2646, %v2758
        %v2775 = vmul.f32 %v2647, %v2759
        %v2776 = vmul.f32 %v2648, %v2760
        %v2777 = vmul.f32 %v2649, %v2761
        %v2778 = vmul.f32 %v2650, %v2762
        %v2779 = vmul.f32 %v2651, %v2763
        %v2780 = vmul.f32 %v2652, %v2764
        %v2781 = vmul.f32 %v2653, %v2765
        %v2782 = vmul.f32 %v2654, %v2766
        %v2783 = vmul.f32 %v2655, %v2767
        %v2784 = vmul.f32 %v2656, %v2768
        %v2785 = vmul.f32 %v2657, %v2769
        %v2786 = vmul.f32 %v2658, %v2770
        %v2787 = vld [vmem:[%s10] sm:$0xff]
        %v2788 = vld [vmem:[%s10 + $0x8] sm:$0xff]
        %v2789 = vld [vmem:[%s10 + $0x10] sm:$0xff]
        %v2790 = vld [vmem:[%s10 + $0x18] sm:$0xff]
        %v2791 = vld [vmem:[%s11] sm:$0xff]
        %v2792 = vld [vmem:[%s11 + $0x8] sm:$0xff]
        %v2793 = vld [vmem:[%s11 + $0x10] sm:$0xff]
        %v2794 = vld [vmem:[%s11 + $0x18] sm:$0xff]
        %2796 = vset.pattern.permute.xlu0 0
        %2797 = vperm.xlu0 %2796, %v2791
        %v2798 = vpop.permute.xlu0 %2797
        %2801 = vset.pattern.permute.xlu0 0
        %2802 = vperm.xlu0 %2801, %v2792
        %v2803 = vpop.permute.xlu0 %2802
        %2806 = vset.pattern.permute.xlu0 0
        %2807 = vperm.xlu0 %2806, %v2793
        %v2808 = vpop.permute.xlu0 %2807
        %2811 = vset.pattern.permute.xlu0 0
        %2812 = vperm.xlu0 %2811, %v2794
        %v2813 = vpop.permute.xlu0 %2812
        %2815 = vmatprep.subr.mxu0 0.0
        %2816 = vmatpush1.msra.mxu0 %v2771
        %2817 = vmatprep.subr.mxu0 0.0
        %2818 = vmatpush1.msra.mxu0 %v2772
        %2819 = vmatprep.subr.mxu0 0.0
        %2820 = vmatpush1.msra.mxu0 %v2773
        %2821 = vmatprep.subr.mxu0 0.0
        %2822 = vmatpush1.msra.mxu0 %v2774
        %2823 = vmatprep.subr.mxu0 0.0
        %2824 = vmatpush1.msra.mxu0 %v2775
        %2825 = vmatprep.subr.mxu0 0.0
        %2826 = vmatpush1.msra.mxu0 %v2776
        %2827 = vmatprep.subr.mxu0 0.0
        %2828 = vmatpush1.msra.mxu0 %v2777
        %2829 = vmatprep.subr.mxu0 0.0
        %2830 = vmatpush1.msra.mxu0 %v2778
        %2831 = vmatprep.subr.mxu0 0.0
        %2832 = vmatpush1.msra.mxu0 %v2779
        %2833 = vmatprep.subr.mxu0 0.0
        %2834 = vmatpush1.msra.mxu0 %v2780
        %2835 = vmatprep.subr.mxu0 0.0
        %2836 = vmatpush1.msra.mxu0 %v2781
        %2837 = vmatprep.subr.mxu0 0.0
        %2838 = vmatpush1.msra.mxu0 %v2782
        %2839 = vmatprep.subr.mxu0 0.0
        %2840 = vmatpush1.msra.mxu0 %v2783
        %2841 = vmatprep.subr.mxu0 0.0
        %2842 = vmatpush1.msra.mxu0 %v2784
        %2843 = vmatprep.subr.mxu0 0.0
        %2844 = vmatpush1.msra.mxu0 %v2785
        %2845 = vmatprep.subr.mxu0 0.0
        %2846 = vmatpush1.msra.mxu0 %v2786
        %2847 = vmatprep.subr.mxu0 0.0
        %2848 = vmatpush1.msra.mxu0 0.0
        %2849 = vmatprep.subr.mxu0 0.0
        %2850 = vmatpush1.msra.mxu0 0.0
        %2851 = vmatprep.subr.mxu0 0.0
        %2852 = vmatpush1.msra.mxu0 0.0
        %2853 = vmatprep.subr.mxu0 0.0
        %2854 = vmatpush1.msra.mxu0 0.0
        %2855 = vmatprep.subr.mxu0 0.0
        %2856 = vmatpush1.msra.mxu0 0.0
        %2857 = vmatprep.subr.mxu0 0.0
        %2858 = vmatpush1.msra.mxu0 0.0
        %2859 = vmatprep.subr.mxu0 0.0
        %2860 = vmatpush1.msra.mxu0 0.0
        %2861 = vmatprep.subr.mxu0 0.0
        %2862 = vmatpush1.msra.mxu0 0.0
        %2863 = vmatprep.subr.mxu0 0.0
        %2864 = vmatpush1.msra.mxu0 0.0
        %2865 = vmatprep.subr.mxu0 0.0
        %2866 = vmatpush1.msra.mxu0 0.0
        %2867 = vmatprep.subr.mxu0 0.0
        %2868 = vmatpush1.msra.mxu0 0.0
        %2869 = vmatprep.subr.mxu0 0.0
        %2870 = vmatpush1.msra.mxu0 0.0
        %2871 = vmatprep.subr.mxu0 0.0
        %2872 = vmatpush1.msra.mxu0 0.0
        %2873 = vmatprep.subr.mxu0 0.0
        %2874 = vmatpush1.msra.mxu0 0.0
        %2875 = vmatprep.subr.mxu0 0.0
        %2876 = vmatpush1.msra.mxu0 0.0
        %2877 = vmatprep.subr.mxu0 0.0
        %2878 = vmatpush1.msra.mxu0 0.0
        %2879 = vmatprep.mubr.f32.mxu0 0.0
        %2880 = vmatmul.mubr.f32.gmra.mrb[0].mxu0 %v2787
        %v2881 = vpop.f32.mrb[0].mxu0
        %v2882 = vadd.f32 %v2798, %v2881
        %v2883 = vpop.f32.mrb[0].mxu0
        %2884 = vmatprep.mubr.f32.mxu0 0.0
        %2885 = vmatmul.mubr.f32.gmra.mrb[0].mxu0 %v2788
        %v2886 = vpop.f32.mrb[0].mxu0
        %v2887 = vadd.f32 %v2803, %v2886
        %v2888 = vpop.f32.mrb[0].mxu0
        %2889 = vmatprep.mubr.f32.mxu0 0.0
        %2890 = vmatmul.mubr.f32.gmra.mrb[0].mxu0 %v2789
        %v2891 = vpop.f32.mrb[0].mxu0
        %v2892 = vadd.f32 %v2808, %v2891
        %v2893 = vpop.f32.mrb[0].mxu0
        %2894 = vmatprep.mubr.f32.mxu0 0.0
        %2895 = vmatmul.mubr.f32.gmra.mrb[0].mxu0 %v2790
        %v2896 = vpop.f32.mrb[0].mxu0
        %v2897 = vadd.f32 %v2813, %v2896
        %v2898 = vpop.f32.mrb[0].mxu0
        %2899 = vdwg.mxu0
        %v2900 = vadd.f32 %v2236, %v2882
        %v2901 = vadd.f32 %v2237, %v2887
        %v2902 = vadd.f32 %v2238, %v2892
        %v2903 = vadd.f32 %v2239, %v2897
        %2904 = vst.msk [vmem:[%s406] sm:$0xff] %vm424, %v2900
        %2905 = vst.msk [vmem:[%s406 + $0x8] sm:$0xff] %vm424, %v2901
        %2906 = vst.msk [vmem:[%s406 + $0x10] sm:$0xff] %vm424, %v2902
        %2907 = vst.msk [vmem:[%s406 + $0x18] sm:$0xff] %vm424, %v2903
        %s2908 = sand.u32 %s291, 1
        %s2909 = scalar_lea.sflag [#allocation3], %s2908
        %s2910 = sand.u32 %s291, 1
        %s2911 = smul.addr %s2910, 32
        %s2912 = scalar_lea.vmem [#allocation2], %s2911
        // Predicated region
        $region69: #{tpu_custom_call.1} parent=67 // pred_check
          %p2913 = pneg %p301
        $region70: #{tpu_custom_call.1} parent=67 // pred_check_branch
          %2915 = sbr.rel (%p2913) target = $region72
        $region71: #{tpu_custom_call.1} parent=67 // pred_region
          %s2917 = ssub.s32 512, 512
          %2918 = vsyncadd %s2909, %s2917
          %s2919 = smul.addr %s26, 4
          %s2920 = smul.addr %s2919, 128
          %s2921 = scalar_lea.hbm %s12, %s2920
          %s2922 = sshll.u32 %s2912, 4
          %s2923 = int_to_ptr.vmem [resolvable:$true] %s2922
          %2928 = dma.vmem_to_hbm [thread:$0]  %s2923, 512, %s2921, %s2909, 128, 128, 8
        $region72: #{tpu_custom_call.1} parent=67 // pred_fallthru
          _
      $region68: #{tpu_custom_call.1} parent=5 // pred_fallthru
        _
      %p2929 = scmp.le.s32.totalorder 2, %s21
      // Predicated region
      $region73: #{tpu_custom_call.1} parent=5 // pred_check
        %p2930 = pneg %p2929
      $region74: #{tpu_custom_call.1} parent=5 // pred_check_branch
        %2932 = sbr.rel (%p2930) target = $region76
      $region75: #{tpu_custom_call.1} parent=5 // pred_region
        %s2933 = ssub.s32 %s21, 2
        // Predicated region
        $region77: #{tpu_custom_call.1} parent=75 // pred_check
          %p2934 = pneg %p307
        $region78: #{tpu_custom_call.1} parent=75 // pred_check_branch
          %2936 = sbr.rel (%p2934) target = $region80
        $region79: #{tpu_custom_call.1} parent=75 // pred_region
          %s2937 = sand.u32 %s292, 1
          %s2938 = scalar_lea.sflag [#allocation3], %s2937
          %s2939 = sand.u32 %s292, 1
          %s2940 = smul.addr %s2939, 32
          %s2941 = scalar_lea.vmem [#allocation2], %s2940
          %2942 = dma.done %s2938, 512
        $region80: #{tpu_custom_call.1} parent=75 // pred_fallthru
          _
      $region76: #{tpu_custom_call.1} parent=5 // pred_fallthru
        _
    $region6: #{tpu_custom_call.1} parent=1 // loop_footer
      %s25 = sadd.s32 1, %s21
    $region7: #{tpu_custom_call.1} parent=1 // loop_footer_branch
      %20 = sbr.rel target = $region3
    $region8: #{tpu_custom_call.1} parent=1 // loop_exit
      _
    %2943 = vsyncpa [#allocation3], 1
    %s2944 = scalar_lea.sflag [#allocation3], 1
    %2945 = vsyncpa %s2944, 1

</llo_original>
